<compile_context>
chip_gen: v7x
topology: tpu7x:2x2x1
jax: 0.10.0
libtpu: 0.0.40
codegen_flags: <defaults>
</compile_context>

<pallas_src>
import jax
import jax.numpy as jnp
from jax.experimental import pallas as pl
from jax.experimental.pallas import tpu as pltpu


# ----------------------------- Pallas kernel --------------------------------
def gcn_kernel(adj_ref, x_ref, w_ref, b_ref, o_ref, acc_ref):
    k = pl.program_id(1)

    @pl.when(k == 0)
    def _():
        acc_ref[...] = jnp.zeros_like(acc_ref)

    # Partial aggregation: (TM, TK) bf16 @ (TK, F) bf16 -> f32 accumulator.
    acc_ref[...] += jnp.dot(adj_ref[...], x_ref[...],
                            preferred_element_type=jnp.float32)

    @pl.when(k == pl.num_programs(1) - 1)
    def _():
        # Epilogue: apply the small (F, C_pad) weight and bias exactly once.
        out = jnp.dot(acc_ref[...], w_ref[...],
                      preferred_element_type=jnp.float32,
                      precision=jax.lax.Precision.HIGHEST)
        o_ref[...] = (out + b_ref[...]).astype(o_ref.dtype)


def _round_up(x, m):
    return (x + m - 1) // m * m


def gcn_conv_pallas(adj, x, w, b, *, tm=512, tk=1024):
    """adj: [N,N] normalized adjacency, x: [N,F], w: [F,C], b: [C]."""
    N, F = x.shape
    C = w.shape[1]
    C_pad = _round_up(max(C, 128), 128)          # lane-dense output stores

    # Clamp tiles to the (128-padded) problem size; keep them (8,128)-aligned.
    tm = min(tm, _round_up(N, 128))
    tk = min(tk, _round_up(N, 128))
    n_m = _round_up(N, tm)                       # padded rows of A_hat / out
    n_k = _round_up(N, tk)                       # padded cols of A_hat / rows of X

    # bf16 matmul inputs (f32 accumulation inside the kernel); zero padding is
    # semantically inert (padded rows/cols contribute nothing, sliced off below).
    adj_p = jnp.zeros((n_m, n_k), jnp.bfloat16).at[:N, :N].set(
        adj.astype(jnp.bfloat16))
    x_p = jnp.zeros((n_k, F), jnp.bfloat16).at[:N, :].set(
        x.astype(jnp.bfloat16))
    w_p = jnp.zeros((F, C_pad), jnp.float32).at[:, :C].set(
        w.astype(jnp.float32))
    b_p = jnp.zeros((1, C_pad), jnp.float32).at[0, :C].set(
        b.astype(jnp.float32))

    grid = (n_m // tm, n_k // tk)

    cost = pl.CostEstimate(
        flops=int(2 * n_m * n_k * F + 2 * n_m * F * C_pad),
        transcendentals=0,
        bytes_accessed=int(2 * n_m * n_k + 2 * n_k * F
                           + 4 * n_m * C_pad + 4 * F * C_pad),
    )

    out = pl.pallas_call(
        gcn_kernel,
        out_shape=jax.ShapeDtypeStruct((n_m, C_pad), jnp.float32),
        grid_spec=pltpu.PrefetchScalarGridSpec(
            num_scalar_prefetch=0,
            grid=grid,
            in_specs=[
                pl.BlockSpec((tm, tk), lambda i, k: (i, k)),     # A_hat tile
                pl.BlockSpec((tk, F), lambda i, k: (k, 0)),      # X tile
                pl.BlockSpec((F, C_pad), lambda i, k: (0, 0)),   # W (resident)
                pl.BlockSpec((1, C_pad), lambda i, k: (0, 0)),   # bias (resident)
            ],
            out_specs=pl.BlockSpec((tm, C_pad), lambda i, k: (i, 0)),
            scratch_shapes=[pltpu.VMEM((tm, F), jnp.float32)],   # f32 accumulator
        ),
        compiler_params=pltpu.CompilerParams(
            dimension_semantics=("parallel", "arbitrary"),
            vmem_limit_bytes=32 << 20,
        ),
        cost_estimate=cost,
    )(adj_p, x_p, w_p, b_p)

    return out[:N, :C]


# ------------------------------ JAX glue -------------------------------------
def build_normalized_adjacency(edge_index, num_nodes):
    """Replicates PyG gcn_norm with add_self_loops=True, edge_weight=1.

    Returns dense A_hat with A_hat[dst, src] = 1/sqrt(deg[src]*deg[dst]).
    """
    row, col = edge_index[0], edge_index[1]          # src, dst
    loop = jnp.arange(num_nodes, dtype=edge_index.dtype)
    row = jnp.concatenate([row, loop])
    col = jnp.concatenate([col, loop])
    ew = jnp.ones(row.shape[0], dtype=jnp.float32)
    deg = jnp.zeros(num_nodes, jnp.float32).at[col].add(ew)
    deg_inv_sqrt = jnp.where(deg > 0, 1.0 / jnp.sqrt(deg), 0.0)
    norm = deg_inv_sqrt[row] * ew * deg_inv_sqrt[col]
    adj = jnp.zeros((num_nodes, num_nodes), jnp.float32).at[col, row].add(norm)
    return adj


class LinearEncoderPallas:
    """GCNConv(num_features -> 64) with Glorot-uniform weights, zero bias."""

    def __init__(self, num_features, out_channels=64, key=jax.random.PRNGKey(0)):
        self.in_channels = num_features
        self.out_channels = out_channels
        limit = (6.0 / (num_features + out_channels)) ** 0.5
        self.w = jax.random.uniform(
            key, (num_features, out_channels), jnp.float32, -limit, limit)
        self.b = jnp.zeros((out_channels,), jnp.float32)

    def __call__(self, x, edge_index):
        n = x.shape[0]
        adj = build_normalized_adjacency(edge_index, n)
        return gcn_conv_pallas(adj, x.astype(jnp.float32), self.w, self.b)


# ------------------------------- main ----------------------------------------
if __name__ == "__main__":
    key = jax.random.PRNGKey(0)
    k_x, k_w = jax.random.split(key)

    num_nodes = 8
    num_features = 16   # cfg.TASK_SPECIFIC.GEOMETRIC.num_features

    x = jax.random.normal(k_x, (num_nodes, num_features), jnp.float32)
    # small deterministic ring graph (undirected: both directions)
    src = jnp.arange(num_nodes, dtype=jnp.int32)
    dst = (src + 1) % num_nodes
    edge_index = jnp.stack(
        [jnp.concatenate([src, dst]), jnp.concatenate([dst, src])], axis=0)

    enc = LinearEncoderPallas(num_features, out_channels=64, key=k_w)
    out = enc(x, edge_index)
    out = jax.block_until_ready(out)

    # pure-JAX references
    adj = build_normalized_adjacency(edge_index, num_nodes)
    ref_f32 = adj @ (x @ enc.w) + enc.b                      # full f32 math
    adj_q = adj.astype(jnp.bfloat16).astype(jnp.float32)     # bf16-input-matched
    x_q = x.astype(jnp.bfloat16).astype(jnp.float32)
    ref_bf16 = (adj_q @ x_q) @ enc.w + enc.b

    assert out.shape == (num_nodes, 64)
    assert jnp.allclose(out, ref_bf16, atol=1e-3, rtol=1e-3)
    assert jnp.allclose(out, ref_f32, atol=2e-2, rtol=2e-2)

    print("KERNEL_OK")
</pallas_src>

<mosaic_0001>
module attributes {stable_mosaic.version = 11 : i64} {
  func.func @gcn_kernel(%arg0: i32, %arg1: i32, %arg2: memref<128x128xbf16, #tpu.memory_space<vmem>>, %arg3: memref<128x16xbf16, #tpu.memory_space<vmem>>, %arg4: memref<16x128xf32, #tpu.memory_space<vmem>>, %arg5: memref<1x128xf32, #tpu.memory_space<vmem>>, %arg6: memref<128x128xf32, #tpu.memory_space<vmem>>, %arg7: memref<128x16xf32, #tpu.memory_space<vmem>>) attributes {dimension_semantics = [#tpu.dimension_semantics<parallel>, #tpu.dimension_semantics<arbitrary>], iteration_bounds = array<i64: 1, 1>, scalar_prefetch = 0 : i64, scratch_operands = 1 : i64, tpu.core_type = #tpu.core_type<tc>, window_params = [{transform_indices = @transform_0, window_bounds = array<i64: 128, 128>}, {transform_indices = @transform_1, window_bounds = array<i64: 128, 16>}, {pipeline_mode = #tpu.pipeline_mode<synchronous>, transform_indices = @transform_2, window_bounds = array<i64: 16, 128>}, {pipeline_mode = #tpu.pipeline_mode<synchronous>, transform_indices = @transform_3, window_bounds = array<i64: 1, 128>}, {transform_indices = @transform_4, window_bounds = array<i64: 128, 128>}]} {
    %c0_i32 = arith.constant 0 : i32
    %0 = arith.cmpi eq, %arg1, %c0_i32 : i32
    %1 = arith.extui %0 : i1 to i32
    %c0_i32_0 = arith.constant 0 : i32
    %2 = arith.cmpi ne, %1, %c0_i32_0 : i32
    scf.if %2 {
      %cst_10 = arith.constant 0.000000e+00 : f32
      %12 = vector.broadcast %cst_10 : f32 to vector<128x16xf32>
      %c0_11 = arith.constant 0 : index
      %c0_12 = arith.constant 0 : index
      %13 = vector.load %arg7[%c0_11, %c0_12] : memref<128x16xf32, #tpu.memory_space<vmem>>, vector<128x16xf32>
      tpu.vector_store %arg7[%c0_11, %c0_12], %12 {strides = array<i32>} : memref<128x16xf32, #tpu.memory_space<vmem>>, vector<128x16xf32>,
    } else {
    }
    %c0 = arith.constant 0 : index
    %c0_1 = arith.constant 0 : index
    %3 = vector.load %arg7[%c0, %c0_1] : memref<128x16xf32, #tpu.memory_space<vmem>>, vector<128x16xf32>
    %c0_2 = arith.constant 0 : index
    %c0_3 = arith.constant 0 : index
    %4 = vector.load %arg2[%c0_2, %c0_3] : memref<128x128xbf16, #tpu.memory_space<vmem>>, vector<128x128xbf16>
    %c0_4 = arith.constant 0 : index
    %c0_5 = arith.constant 0 : index
    %5 = vector.load %arg3[%c0_4, %c0_5] : memref<128x16xbf16, #tpu.memory_space<vmem>>, vector<128x16xbf16>
    %cst = arith.constant dense<0.000000e+00> : vector<128x16xf32>
    %6 = tpu.matmul %4, %5, %cst {dimension_numbers = #tpu.dot_dimension_numbers<[1], [0], [0], [1], [0, 0, 1, 1], [], []>} : vector<128x128xbf16>, vector<128x16xbf16>, vector<128x16xf32> -> vector<128x16xf32>
    %7 = arith.addf %3, %6 : vector<128x16xf32>
    %c0_6 = arith.constant 0 : index
    %c0_7 = arith.constant 0 : index
    %8 = vector.load %arg7[%c0_6, %c0_7] : memref<128x16xf32, #tpu.memory_space<vmem>>, vector<128x16xf32>
    tpu.vector_store %arg7[%c0_6, %c0_7], %7 {strides = array<i32>} : memref<128x16xf32, #tpu.memory_space<vmem>>, vector<128x16xf32>,
    %c0_i32_8 = arith.constant 0 : i32
    %9 = arith.cmpi eq, %arg1, %c0_i32_8 : i32
    %10 = arith.extui %9 : i1 to i32
    %c0_i32_9 = arith.constant 0 : i32
    %11 = arith.cmpi ne, %10, %c0_i32_9 : i32
    scf.if %11 {
      %c0_10 = arith.constant 0 : index
      %c0_11 = arith.constant 0 : index
      %12 = vector.load %arg7[%c0_10, %c0_11] : memref<128x16xf32, #tpu.memory_space<vmem>>, vector<128x16xf32>
      %c0_12 = arith.constant 0 : index
      %c0_13 = arith.constant 0 : index
      %13 = vector.load %arg4[%c0_12, %c0_13] : memref<16x128xf32, #tpu.memory_space<vmem>>, vector<16x128xf32>
      %cst_14 = arith.constant dense<0.000000e+00> : vector<128x128xf32>
      %14 = tpu.matmul %12, %13, %cst_14 {dimension_numbers = #tpu.dot_dimension_numbers<[1], [0], [0], [1], [0, 0, 1, 1], [], []>, precision = #tpu.contract_precision<fp32>} : vector<128x16xf32>, vector<16x128xf32>, vector<128x128xf32> -> vector<128x128xf32>
      %c0_15 = arith.constant 0 : index
      %c0_16 = arith.constant 0 : index
      %15 = vector.load %arg5[%c0_15, %c0_16] : memref<1x128xf32, #tpu.memory_space<vmem>>, vector<1x128xf32>
      %16 = vector.broadcast %15 : vector<1x128xf32> to vector<128x128xf32>
      %17 = arith.addf %14, %16 : vector<128x128xf32>
      %c0_17 = arith.constant 0 : index
      %c0_18 = arith.constant 0 : index
      %18 = vector.load %arg6[%c0_17, %c0_18] : memref<128x128xf32, #tpu.memory_space<vmem>>, vector<128x128xf32>
      tpu.vector_store %arg6[%c0_17, %c0_18], %17 {strides = array<i32>} : memref<128x128xf32, #tpu.memory_space<vmem>>, vector<128x128xf32>,
    } else {
    }
    return
  }
  func.func @transform_0(%arg0: i32, %arg1: i32) -> (i32, i32) {
    %c0_i32 = arith.constant 0 : i32
    return %arg0, %arg1 : i32, i32
  }
  func.func @transform_1(%arg0: i32, %arg1: i32) -> (i32, i32) {
    %c0_i32 = arith.constant 0 : i32
    %c0_i32_0 = arith.constant 0 : i32
    return %arg1, %c0_i32 : i32, i32
  }
  func.func @transform_2(%arg0: i32, %arg1: i32) -> (i32, i32) {
    %c0_i32 = arith.constant 0 : i32
    %c0_i32_0 = arith.constant 0 : i32
    %c0_i32_1 = arith.constant 0 : i32
    return %c0_i32, %c0_i32_0 : i32, i32
  }
  func.func @transform_3(%arg0: i32, %arg1: i32) -> (i32, i32) {
    %c0_i32 = arith.constant 0 : i32
    %c0_i32_0 = arith.constant 0 : i32
    %c0_i32_1 = arith.constant 0 : i32
    return %c0_i32, %c0_i32_0 : i32, i32
  }
  func.func @transform_4(%arg0: i32, %arg1: i32) -> (i32, i32) {
    %c0_i32 = arith.constant 0 : i32
    %c0_i32_0 = arith.constant 0 : i32
    return %arg0, %c0_i32 : i32, i32
  }
}

</mosaic_0001>

<llo_original>
// kernel: tpu_custom_call.1
$region0: #{tpu_custom_call.1}
  #allocation0 [shape = 'u32[]', space=smem, size = 0x4, offset = 0x4, fixed_abs, tag = 'smem constant byte address 0x4 - core index']
  #allocation1 [shape = 'u32[144,128]{1,0:T(1,128)}', space=vmem, size = 0x12000, scoped, tag = 'internal scratch']
  #allocation2 [shape = 'f32[128,16]{1,0:T(8,128)}', space=vmem, size = 0x10000, scoped, tag = 'scratch operand']
  %s0 = inlined_call_operand.vmem [shape: bf16[128,128], index: 0, kind: input, shape index: {}]
  %s1 = inlined_call_operand.vmem [shape: bf16[128,16], index: 1, kind: input, shape index: {}]
  %s2 = inlined_call_operand.hbm [shape: f32[16,128], index: 2, kind: input, shape index: {}]
  %s3 = inlined_call_operand.vmem [shape: f32[1,128], index: 3, kind: input, shape index: {}]
  %s4 = inlined_call_operand.hbm [shape: f32[128,128], index: 4, kind: output, shape index: {}]
  %s5 = sld [smem:[#allocation0]]
  $region38: #{tpu_custom_call.1} parent=0
    _
  %s7 = ssub.s32 1, %s5
  %s8 = scalar_select 0, %s7, %s5
  $region1: #{tpu_custom_call.1} parent=0
    #allocation3 [shape = 'u8[8192]{0}', space=vmem, size = 0x2000, scoped, tag = 'input window, operand 2, single buffered']
    #allocation4 [shape = 's32[1]{0}', space=sflag, size = 0x4, scoped, tag = 'scoped memory for tpu_custom_call.1']
    #allocation5 [shape = 's32[1]{0}', space=sflag, size = 0x4, scoped, tag = 'scoped memory for tpu_custom_call.1']
    #allocation6 [shape = 'u8[65536]{0}', space=vmem, size = 0x10000, scoped, tag = 'output window, operand 0, single buffered']
    %9 = vsyncpa [#allocation4], 0
    %10 = vsyncpa [#allocation5], 0
    // Predicated region
    $region2: #{tpu_custom_call.1} parent=1 // pred_check
      _
    $region3: #{tpu_custom_call.1} parent=1 // pred_check_branch
      %12 = sbr.rel (0) target = $region5
    $region4: #{tpu_custom_call.1} parent=1 // pred_region
      _
    $region5: #{tpu_custom_call.1} parent=1 // pred_fallthru
      _
    // Predicated region
    $region6: #{tpu_custom_call.1} parent=1 // pred_check
      _
    $region7: #{tpu_custom_call.1} parent=1 // pred_check_branch
      %14 = sbr.rel (0) target = $region9
    $region8: #{tpu_custom_call.1} parent=1 // pred_region
      _
    $region9: #{tpu_custom_call.1} parent=1 // pred_fallthru
      _
    // Predicated region
    $region10: #{tpu_custom_call.1} parent=1 // pred_check
      _
    $region11: #{tpu_custom_call.1} parent=1 // pred_check_branch
      %16 = sbr.rel (0) target = $region13
    $region12: #{tpu_custom_call.1} parent=1 // pred_region
      %s18 = ssub.s32 256, 256
      %19 = vsyncadd [#allocation4], %s18
      %s20 = sshll.u32 [#allocation3], 4
      %s21 = int_to_ptr.vmem [resolvable:$true] %s20
      %26 = dma.hbm_to_vmem [thread:$0]  %s2, 256, %s21, [#allocation4], 128, 128, 8
    $region13: #{tpu_custom_call.1} parent=1 // pred_fallthru
      _
    // Predicated region
    $region14: #{tpu_custom_call.1} parent=1 // pred_check
      _
    $region15: #{tpu_custom_call.1} parent=1 // pred_check_branch
      %28 = sbr.rel (0) target = $region17
    $region16: #{tpu_custom_call.1} parent=1 // pred_region
      _
    $region17: #{tpu_custom_call.1} parent=1 // pred_fallthru
      _
    // Predicated region
    $region18: #{tpu_custom_call.1} parent=1 // pred_check
      _
    $region19: #{tpu_custom_call.1} parent=1 // pred_check_branch
      %30 = sbr.rel (0) target = $region21
    $region20: #{tpu_custom_call.1} parent=1 // pred_region
      %31 = dma.done [#allocation4], 256
    $region21: #{tpu_custom_call.1} parent=1 // pred_fallthru
      _
    %p33 = scmp.eq.s32.totalorder 0, 0
    // Predicated region
    $region22: #{tpu_custom_call.1} parent=1 // pred_check
      %p34 = pneg %p33
    $region23: #{tpu_custom_call.1} parent=1 // pred_check_branch
      %36 = sbr.rel (%p34) target = $region25
    $region24: #{tpu_custom_call.1} parent=1 // pred_region
      %vm37 = vcmask 130048
      %38 = vst.msk [vmem:[#allocation2] sm:$0xff] %vm37, 0.0
      %39 = vst.msk [vmem:[#allocation2 + $0x8] sm:$0xff] %vm37, 0.0
      %40 = vst.msk [vmem:[#allocation2 + $0x10] sm:$0xff] %vm37, 0.0
      %41 = vst.msk [vmem:[#allocation2 + $0x18] sm:$0xff] %vm37, 0.0
      %42 = vst.msk [vmem:[#allocation2 + $0x20] sm:$0xff] %vm37, 0.0
      %43 = vst.msk [vmem:[#allocation2 + $0x28] sm:$0xff] %vm37, 0.0
      %44 = vst.msk [vmem:[#allocation2 + $0x30] sm:$0xff] %vm37, 0.0
      %45 = vst.msk [vmem:[#allocation2 + $0x38] sm:$0xff] %vm37, 0.0
      %46 = vst.msk [vmem:[#allocation2 + $0x40] sm:$0xff] %vm37, 0.0
      %47 = vst.msk [vmem:[#allocation2 + $0x48] sm:$0xff] %vm37, 0.0
      %48 = vst.msk [vmem:[#allocation2 + $0x50] sm:$0xff] %vm37, 0.0
      %49 = vst.msk [vmem:[#allocation2 + $0x58] sm:$0xff] %vm37, 0.0
      %50 = vst.msk [vmem:[#allocation2 + $0x60] sm:$0xff] %vm37, 0.0
      %51 = vst.msk [vmem:[#allocation2 + $0x68] sm:$0xff] %vm37, 0.0
      %52 = vst.msk [vmem:[#allocation2 + $0x70] sm:$0xff] %vm37, 0.0
      %53 = vst.msk [vmem:[#allocation2 + $0x78] sm:$0xff] %vm37, 0.0
    $region25: #{tpu_custom_call.1} parent=1 // pred_fallthru
      _
    %v54 = vld [vmem:[#allocation2] sm:$0xff]
    %v55 = vld [vmem:[#allocation2 + $0x8] sm:$0xff]
    %v56 = vld [vmem:[#allocation2 + $0x10] sm:$0xff]
    %v57 = vld [vmem:[#allocation2 + $0x18] sm:$0xff]
    %v58 = vld [vmem:[#allocation2 + $0x20] sm:$0xff]
    %v59 = vld [vmem:[#allocation2 + $0x28] sm:$0xff]
    %v60 = vld [vmem:[#allocation2 + $0x30] sm:$0xff]
    %v61 = vld [vmem:[#allocation2 + $0x38] sm:$0xff]
    %v62 = vld [vmem:[#allocation2 + $0x40] sm:$0xff]
    %v63 = vld [vmem:[#allocation2 + $0x48] sm:$0xff]
    %v64 = vld [vmem:[#allocation2 + $0x50] sm:$0xff]
    %v65 = vld [vmem:[#allocation2 + $0x58] sm:$0xff]
    %v66 = vld [vmem:[#allocation2 + $0x60] sm:$0xff]
    %v67 = vld [vmem:[#allocation2 + $0x68] sm:$0xff]
    %v68 = vld [vmem:[#allocation2 + $0x70] sm:$0xff]
    %v69 = vld [vmem:[#allocation2 + $0x78] sm:$0xff]
    %v70 = vld [vmem:[%s0] sm:$0xf]
    %v71 = vld [vmem:[%s0 + $0x4] sm:$0xf]
    %v72 = vld [vmem:[%s0 + $0x8] sm:$0xf]
    %v73 = vld [vmem:[%s0 + $0xc] sm:$0xf]
    %v74 = vld [vmem:[%s0 + $0x10] sm:$0xf]
    %v75 = vld [vmem:[%s0 + $0x14] sm:$0xf]
    %v76 = vld [vmem:[%s0 + $0x18] sm:$0xf]
    %v77 = vld [vmem:[%s0 + $0x1c] sm:$0xf]
    %v78 = vld [vmem:[%s0 + $0x20] sm:$0xf]
    %v79 = vld [vmem:[%s0 + $0x24] sm:$0xf]
    %v80 = vld [vmem:[%s0 + $0x28] sm:$0xf]
    %v81 = vld [vmem:[%s0 + $0x2c] sm:$0xf]
    %v82 = vld [vmem:[%s0 + $0x30] sm:$0xf]
    %v83 = vld [vmem:[%s0 + $0x34] sm:$0xf]
    %v84 = vld [vmem:[%s0 + $0x38] sm:$0xf]
    %v85 = vld [vmem:[%s0 + $0x3c] sm:$0xf]
    %v86 = vld [vmem:[%s1] sm:$0xf]
    %v87 = vld [vmem:[%s1 + $0x4] sm:$0xf]
    %v88 = vld [vmem:[%s1 + $0x8] sm:$0xf]
    %v89 = vld [vmem:[%s1 + $0xc] sm:$0xf]
    %v90 = vld [vmem:[%s1 + $0x10] sm:$0xf]
    %v91 = vld [vmem:[%s1 + $0x14] sm:$0xf]
    %v92 = vld [vmem:[%s1 + $0x18] sm:$0xf]
    %v93 = vld [vmem:[%s1 + $0x1c] sm:$0xf]
    %v94 = vld [vmem:[%s1 + $0x20] sm:$0xf]
    %v95 = vld [vmem:[%s1 + $0x24] sm:$0xf]
    %v96 = vld [vmem:[%s1 + $0x28] sm:$0xf]
    %v97 = vld [vmem:[%s1 + $0x2c] sm:$0xf]
    %v98 = vld [vmem:[%s1 + $0x30] sm:$0xf]
    %v99 = vld [vmem:[%s1 + $0x34] sm:$0xf]
    %v100 = vld [vmem:[%s1 + $0x38] sm:$0xf]
    %v101 = vld [vmem:[%s1 + $0x3c] sm:$0xf]
    %v118 = vunpack.c.l.b16 %v70
    %v119 = vunpack.c.l.b16 %v71
    %v120 = vunpack.c.l.b16 %v72
    %v121 = vunpack.c.l.b16 %v73
    %v122 = vunpack.c.l.b16 %v74
    %v123 = vunpack.c.l.b16 %v75
    %v124 = vunpack.c.l.b16 %v76
    %v125 = vunpack.c.l.b16 %v77
    %v126 = vunpack.c.l.b16 %v78
    %v127 = vunpack.c.l.b16 %v79
    %v128 = vunpack.c.l.b16 %v80
    %v129 = vunpack.c.l.b16 %v81
    %v130 = vunpack.c.l.b16 %v82
    %v131 = vunpack.c.l.b16 %v83
    %v132 = vunpack.c.l.b16 %v84
    %v133 = vunpack.c.l.b16 %v85
    %v134 = vpack.c.b16 %v119, %v118
    %v135 = vpack.c.b16 %v121, %v120
    %v136 = vpack.c.b16 %v123, %v122
    %v137 = vpack.c.b16 %v125, %v124
    %v138 = vpack.c.b16 %v127, %v126
    %v139 = vpack.c.b16 %v129, %v128
    %v140 = vpack.c.b16 %v131, %v130
    %v141 = vpack.c.b16 %v133, %v132
    %v166 = vunpack.c.l.b16 %v86
    %v167 = vunpack.c.l.b16 %v87
    %v168 = vunpack.c.l.b16 %v88
    %v169 = vunpack.c.l.b16 %v89
    %v170 = vunpack.c.l.b16 %v90
    %v171 = vunpack.c.l.b16 %v91
    %v172 = vunpack.c.l.b16 %v92
    %v173 = vunpack.c.l.b16 %v93
    %v174 = vunpack.c.l.b16 %v94
    %v175 = vunpack.c.l.b16 %v95
    %v176 = vunpack.c.l.b16 %v96
    %v177 = vunpack.c.l.b16 %v97
    %v178 = vunpack.c.l.b16 %v98
    %v179 = vunpack.c.l.b16 %v99
    %v180 = vunpack.c.l.b16 %v100
    %v181 = vunpack.c.l.b16 %v101
    %v182 = vpack.c.b16 %v167, %v166
    %v183 = vpack.c.b16 %v169, %v168
    %v184 = vpack.c.b16 %v171, %v170
    %v185 = vpack.c.b16 %v173, %v172
    %v186 = vpack.c.b16 %v175, %v174
    %v187 = vpack.c.b16 %v177, %v176
    %v188 = vpack.c.b16 %v179, %v178
    %v189 = vpack.c.b16 %v181, %v180
    %198 = vmatprep.subr.bf16.mxu0 0
    %199 = vmatpush1.bf16.msra.mxu0 %v182
    %200 = vmatprep.subr.bf16.mxu0 0
    %201 = vmatpush1.bf16.msra.mxu0 %v183
    %202 = vmatprep.subr.bf16.mxu0 0
    %203 = vmatpush1.bf16.msra.mxu0 %v184
    %204 = vmatprep.subr.bf16.mxu0 0
    %205 = vmatpush1.bf16.msra.mxu0 %v185
    %206 = vmatprep.subr.bf16.mxu0 0
    %207 = vmatpush1.bf16.msra.mxu0 %v186
    %208 = vmatprep.subr.bf16.mxu0 0
    %209 = vmatpush1.bf16.msra.mxu0 %v187
    %210 = vmatprep.subr.bf16.mxu0 0
    %211 = vmatpush1.bf16.msra.mxu0 %v188
    %212 = vmatprep.subr.bf16.mxu0 0
    %213 = vmatpush1.bf16.msra.mxu0 %v189
    %214 = vmatprep.subr.bf16.mxu0 0
    %215 = vmatpush1.bf16.msra.mxu0 0
    %216 = vmatprep.subr.bf16.mxu0 0
    %217 = vmatpush1.bf16.msra.mxu0 0
    %218 = vmatprep.subr.bf16.mxu0 0
    %219 = vmatpush1.bf16.msra.mxu0 0
    %220 = vmatprep.subr.bf16.mxu0 0
    %221 = vmatpush1.bf16.msra.mxu0 0
    %222 = vmatprep.subr.bf16.mxu0 0
    %223 = vmatpush1.bf16.msra.mxu0 0
    %224 = vmatprep.subr.bf16.mxu0 0
    %225 = vmatpush1.bf16.msra.mxu0 0
    %226 = vmatprep.subr.bf16.mxu0 0
    %227 = vmatpush1.bf16.msra.mxu0 0
    %228 = vmatprep.subr.bf16.mxu0 0
    %229 = vmatpush1.bf16.msra.mxu0 0
    %230 = vmatprep.mubr.bf16.mxu0 0
    %231 = vmatmul.mubr.bf16.gmra.mrb[0].mxu0 %v134
    %v232 = vpop.f32.mrb[0].mxu0
    %v233 = vadd.f32 0.0, %v232
    %v234 = vpop.f32.mrb[0].mxu0
    %v235 = vpop.f32.mrb[0].mxu0
    %v236 = vadd.f32 0.0, %v235
    %v237 = vpop.f32.mrb[0].mxu0
    %238 = vmatprep.mubr.bf16.mxu0 0
    %239 = vmatmul.mubr.bf16.gmra.mrb[0].mxu0 %v135
    %v240 = vpop.f32.mrb[0].mxu0
    %v241 = vadd.f32 0.0, %v240
    %v242 = vpop.f32.mrb[0].mxu0
    %v243 = vpop.f32.mrb[0].mxu0
    %v244 = vadd.f32 0.0, %v243
    %v245 = vpop.f32.mrb[0].mxu0
    %246 = vmatprep.mubr.bf16.mxu0 0
    %247 = vmatmul.mubr.bf16.gmra.mrb[0].mxu0 %v136
    %v248 = vpop.f32.mrb[0].mxu0
    %v249 = vadd.f32 0.0, %v248
    %v250 = vpop.f32.mrb[0].mxu0
    %v251 = vpop.f32.mrb[0].mxu0
    %v252 = vadd.f32 0.0, %v251
    %v253 = vpop.f32.mrb[0].mxu0
    %254 = vmatprep.mubr.bf16.mxu0 0
    %255 = vmatmul.mubr.bf16.gmra.mrb[0].mxu0 %v137
    %v256 = vpop.f32.mrb[0].mxu0
    %v257 = vadd.f32 0.0, %v256
    %v258 = vpop.f32.mrb[0].mxu0
    %v259 = vpop.f32.mrb[0].mxu0
    %v260 = vadd.f32 0.0, %v259
    %v261 = vpop.f32.mrb[0].mxu0
    %262 = vmatprep.mubr.bf16.mxu0 0
    %263 = vmatmul.mubr.bf16.gmra.mrb[0].mxu0 %v138
    %v264 = vpop.f32.mrb[0].mxu0
    %v265 = vadd.f32 0.0, %v264
    %v266 = vpop.f32.mrb[0].mxu0
    %v267 = vpop.f32.mrb[0].mxu0
    %v268 = vadd.f32 0.0, %v267
    %v269 = vpop.f32.mrb[0].mxu0
    %270 = vmatprep.mubr.bf16.mxu0 0
    %271 = vmatmul.mubr.bf16.gmra.mrb[0].mxu0 %v139
    %v272 = vpop.f32.mrb[0].mxu0
    %v273 = vadd.f32 0.0, %v272
    %v274 = vpop.f32.mrb[0].mxu0
    %v275 = vpop.f32.mrb[0].mxu0
    %v276 = vadd.f32 0.0, %v275
    %v277 = vpop.f32.mrb[0].mxu0
    %278 = vmatprep.mubr.bf16.mxu0 0
    %279 = vmatmul.mubr.bf16.gmra.mrb[0].mxu0 %v140
    %v280 = vpop.f32.mrb[0].mxu0
    %v281 = vadd.f32 0.0, %v280
    %v282 = vpop.f32.mrb[0].mxu0
    %v283 = vpop.f32.mrb[0].mxu0
    %v284 = vadd.f32 0.0, %v283
    %v285 = vpop.f32.mrb[0].mxu0
    %286 = vmatprep.mubr.bf16.mxu0 0
    %287 = vmatmul.mubr.bf16.gmra.mrb[0].mxu0 %v141
    %v288 = vpop.f32.mrb[0].mxu0
    %v289 = vadd.f32 0.0, %v288
    %v290 = vpop.f32.mrb[0].mxu0
    %v291 = vpop.f32.mrb[0].mxu0
    %v292 = vadd.f32 0.0, %v291
    %v293 = vpop.f32.mrb[0].mxu0
    %294 = vdwg.mxu0
    %v295 = vadd.f32 %v54, %v233
    %v296 = vadd.f32 %v55, %v236
    %v297 = vadd.f32 %v56, %v241
    %v298 = vadd.f32 %v57, %v244
    %v299 = vadd.f32 %v58, %v249
    %v300 = vadd.f32 %v59, %v252
    %v301 = vadd.f32 %v60, %v257
    %v302 = vadd.f32 %v61, %v260
    %v303 = vadd.f32 %v62, %v265
    %v304 = vadd.f32 %v63, %v268
    %v305 = vadd.f32 %v64, %v273
    %v306 = vadd.f32 %v65, %v276
    %v307 = vadd.f32 %v66, %v281
    %v308 = vadd.f32 %v67, %v284
    %v309 = vadd.f32 %v68, %v289
    %v310 = vadd.f32 %v69, %v292
    %vm311 = vcmask 130048
    %312 = vst.msk [vmem:[#allocation2] sm:$0xff] %vm311, %v295
    %313 = vst.msk [vmem:[#allocation2 + $0x8] sm:$0xff] %vm311, %v296
    %314 = vst.msk [vmem:[#allocation2 + $0x10] sm:$0xff] %vm311, %v297
    %315 = vst.msk [vmem:[#allocation2 + $0x18] sm:$0xff] %vm311, %v298
    %316 = vst.msk [vmem:[#allocation2 + $0x20] sm:$0xff] %vm311, %v299
    %317 = vst.msk [vmem:[#allocation2 + $0x28] sm:$0xff] %vm311, %v300
    %318 = vst.msk [vmem:[#allocation2 + $0x30] sm:$0xff] %vm311, %v301
    %319 = vst.msk [vmem:[#allocation2 + $0x38] sm:$0xff] %vm311, %v302
    %320 = vst.msk [vmem:[#allocation2 + $0x40] sm:$0xff] %vm311, %v303
    %321 = vst.msk [vmem:[#allocation2 + $0x48] sm:$0xff] %vm311, %v304
    %322 = vst.msk [vmem:[#allocation2 + $0x50] sm:$0xff] %vm311, %v305
    %323 = vst.msk [vmem:[#allocation2 + $0x58] sm:$0xff] %vm311, %v306
    %324 = vst.msk [vmem:[#allocation2 + $0x60] sm:$0xff] %vm311, %v307
    %325 = vst.msk [vmem:[#allocation2 + $0x68] sm:$0xff] %vm311, %v308
    %326 = vst.msk [vmem:[#allocation2 + $0x70] sm:$0xff] %vm311, %v309
    %327 = vst.msk [vmem:[#allocation2 + $0x78] sm:$0xff] %vm311, %v310
    // Predicated region
    $region26: #{tpu_custom_call.1} parent=1 // pred_check
      %p328 = pneg %p33
    $region27: #{tpu_custom_call.1} parent=1 // pred_check_branch
      %330 = sbr.rel (%p328) target = $region29
    $region28: #{tpu_custom_call.1} parent=1 // pred_region
      %v331 = vld [vmem:[#allocation2] sm:$0xff]
      %v332 = vld [vmem:[#allocation2 + $0x8] sm:$0xff]
      %v333 = vld [vmem:[#allocation2 + $0x10] sm:$0xff]
      %v334 = vld [vmem:[#allocation2 + $0x18] sm:$0xff]
      %v335 = vld [vmem:[#allocation2 + $0x20] sm:$0xff]
      %v336 = vld [vmem:[#allocation2 + $0x28] sm:$0xff]
      %v337 = vld [vmem:[#allocation2 + $0x30] sm:$0xff]
      %v338 = vld [vmem:[#allocation2 + $0x38] sm:$0xff]
      %v339 = vld [vmem:[#allocation2 + $0x40] sm:$0xff]
      %v340 = vld [vmem:[#allocation2 + $0x48] sm:$0xff]
      %v341 = vld [vmem:[#allocation2 + $0x50] sm:$0xff]
      %v342 = vld [vmem:[#allocation2 + $0x58] sm:$0xff]
      %v343 = vld [vmem:[#allocation2 + $0x60] sm:$0xff]
      %v344 = vld [vmem:[#allocation2 + $0x68] sm:$0xff]
      %v345 = vld [vmem:[#allocation2 + $0x70] sm:$0xff]
      %v346 = vld [vmem:[#allocation2 + $0x78] sm:$0xff]
      %v347 = vld [vmem:[#allocation3] sm:$0xff]
      %v348 = vld [vmem:[#allocation3 + $0x8] sm:$0xff]
      %v349 = vld [vmem:[%s3] sm:$0x1]
      %v351 = vlaneseq
      %v352 = vshrl.u32 %v351, 7
      %v353 = vsub.s32 0, %v352
      %v354 = vrot.slane %v349, %v353
      %v357 = vsel %vm311, %v331, 0
      %v360 = vsel %vm311, %v332, 0
      %v363 = vsel %vm311, %v333, 0
      %v366 = vsel %vm311, %v334, 0
      %v369 = vsel %vm311, %v335, 0
      %v372 = vsel %vm311, %v336, 0
      %v375 = vsel %vm311, %v337, 0
      %v378 = vsel %vm311, %v338, 0
      %v381 = vsel %vm311, %v339, 0
      %v384 = vsel %vm311, %v340, 0
      %v387 = vsel %vm311, %v341, 0
      %v390 = vsel %vm311, %v342, 0
      %v393 = vsel %vm311, %v343, 0
      %v396 = vsel %vm311, %v344, 0
      %v399 = vsel %vm311, %v345, 0
      %v402 = vsel %vm311, %v346, 0
      %404 = vmatprep.subr.mxu0 0.0
      %v405 = vand.u32 %v347, 4294901760
      %406 = vmatpush1.msra.mxu0 %v405
      %407 = vmatprep.subr.mxu0 0.0
      %v408 = vand.u32 %v348, 4294901760
      %409 = vmatpush1.msra.mxu0 %v408
      %410 = vmatprep.subr.mxu0 0.0
      %411 = vmatpush1.msra.mxu0 0.0
      %412 = vmatprep.subr.mxu0 0.0
      %413 = vmatpush1.msra.mxu0 0.0
      %414 = vmatprep.subr.mxu0 0.0
      %415 = vmatpush1.msra.mxu0 0.0
      %416 = vmatprep.subr.mxu0 0.0
      %417 = vmatpush1.msra.mxu0 0.0
      %418 = vmatprep.subr.mxu0 0.0
      %419 = vmatpush1.msra.mxu0 0.0
      %420 = vmatprep.subr.mxu0 0.0
      %421 = vmatpush1.msra.mxu0 0.0
      %422 = vmatprep.subr.mxu0 0.0
      %423 = vmatpush1.msra.mxu0 0.0
      %424 = vmatprep.subr.mxu0 0.0
      %425 = vmatpush1.msra.mxu0 0.0
      %426 = vmatprep.subr.mxu0 0.0
      %427 = vmatpush1.msra.mxu0 0.0
      %428 = vmatprep.subr.mxu0 0.0
      %429 = vmatpush1.msra.mxu0 0.0
      %430 = vmatprep.subr.mxu0 0.0
      %431 = vmatpush1.msra.mxu0 0.0
      %432 = vmatprep.subr.mxu0 0.0
      %433 = vmatpush1.msra.mxu0 0.0
      %434 = vmatprep.subr.mxu0 0.0
      %435 = vmatpush1.msra.mxu0 0.0
      %436 = vmatprep.subr.mxu0 0.0
      %437 = vmatpush1.msra.mxu0 0.0
      %438 = vmatprep.subr.mxu0 0.0
      %439 = vmatpush1.msra.mxu0 0.0
      %440 = vmatprep.subr.mxu0 0.0
      %441 = vmatpush1.msra.mxu0 0.0
      %442 = vmatprep.subr.mxu0 0.0
      %443 = vmatpush1.msra.mxu0 0.0
      %444 = vmatprep.subr.mxu0 0.0
      %445 = vmatpush1.msra.mxu0 0.0
      %446 = vmatprep.subr.mxu0 0.0
      %447 = vmatpush1.msra.mxu0 0.0
      %448 = vmatprep.subr.mxu0 0.0
      %449 = vmatpush1.msra.mxu0 0.0
      %450 = vmatprep.subr.mxu0 0.0
      %451 = vmatpush1.msra.mxu0 0.0
      %452 = vmatprep.subr.mxu0 0.0
      %453 = vmatpush1.msra.mxu0 0.0
      %454 = vmatprep.subr.mxu0 0.0
      %455 = vmatpush1.msra.mxu0 0.0
      %456 = vmatprep.subr.mxu0 0.0
      %457 = vmatpush1.msra.mxu0 0.0
      %458 = vmatprep.subr.mxu0 0.0
      %459 = vmatpush1.msra.mxu0 0.0
      %460 = vmatprep.subr.mxu0 0.0
      %461 = vmatpush1.msra.mxu0 0.0
      %462 = vmatprep.subr.mxu0 0.0
      %463 = vmatpush1.msra.mxu0 0.0
      %464 = vmatprep.subr.mxu0 0.0
      %465 = vmatpush1.msra.mxu0 0.0
      %466 = vmatprep.subr.mxu0 0.0
      %467 = vmatpush1.msra.mxu0 0.0
      %468 = vmatprep.subr.mxu0 0.0
      %469 = vmatpush1.msra.mxu0 0.0
      %470 = vmatprep.mubr.f32.mxu0 0.0
      %v471 = vand.u32 %v357, 4294901760
      %v472 = vsub.f32 %v357, %v471
      %v473 = vand.u32 %v472, 4294901760
      %v474 = vsub.f32 %v472, %v473
      %v475 = vand.u32 %v474, 4294901760
      %476 = vmatmul.mubr.f32.gmra.mrb[0].mxu0 %v475
      %v477 = vpop.f32.mrb[0].mxu0
      %v478 = vadd.f32 %v354, %v477
      %v479 = vpop.f32.mrb[0].mxu0
      %480 = vmatprep.mubr.f32.mxu0 0.0
      %v481 = vand.u32 %v360, 4294901760
      %v482 = vsub.f32 %v360, %v481
      %v483 = vand.u32 %v482, 4294901760
      %v484 = vsub.f32 %v482, %v483
      %v485 = vand.u32 %v484, 4294901760
      %486 = vmatmul.mubr.f32.gmra.mrb[0].mxu0 %v485
      %v487 = vpop.f32.mrb[0].mxu0
      %v488 = vadd.f32 %v354, %v487
      %v489 = vpop.f32.mrb[0].mxu0
      %490 = vmatprep.mubr.f32.mxu0 0.0
      %v491 = vand.u32 %v363, 4294901760
      %v492 = vsub.f32 %v363, %v491
      %v493 = vand.u32 %v492, 4294901760
      %v494 = vsub.f32 %v492, %v493
      %v495 = vand.u32 %v494, 4294901760
      %496 = vmatmul.mubr.f32.gmra.mrb[0].mxu0 %v495
      %v497 = vpop.f32.mrb[0].mxu0
      %v498 = vadd.f32 %v354, %v497
      %v499 = vpop.f32.mrb[0].mxu0
      %500 = vmatprep.mubr.f32.mxu0 0.0
      %v501 = vand.u32 %v366, 4294901760
      %v502 = vsub.f32 %v366, %v501
      %v503 = vand.u32 %v502, 4294901760
      %v504 = vsub.f32 %v502, %v503
      %v505 = vand.u32 %v504, 4294901760
      %506 = vmatmul.mubr.f32.gmra.mrb[0].mxu0 %v505
      %v507 = vpop.f32.mrb[0].mxu0
      %v508 = vadd.f32 %v354, %v507
      %v509 = vpop.f32.mrb[0].mxu0
      %510 = vmatprep.mubr.f32.mxu0 0.0
      %v511 = vand.u32 %v369, 4294901760
      %v512 = vsub.f32 %v369, %v511
      %v513 = vand.u32 %v512, 4294901760
      %v514 = vsub.f32 %v512, %v513
      %v515 = vand.u32 %v514, 4294901760
      %516 = vmatmul.mubr.f32.gmra.mrb[0].mxu0 %v515
      %v517 = vpop.f32.mrb[0].mxu0
      %v518 = vadd.f32 %v354, %v517
      %v519 = vpop.f32.mrb[0].mxu0
      %520 = vmatprep.mubr.f32.mxu0 0.0
      %v521 = vand.u32 %v372, 4294901760
      %v522 = vsub.f32 %v372, %v521
      %v523 = vand.u32 %v522, 4294901760
      %v524 = vsub.f32 %v522, %v523
      %v525 = vand.u32 %v524, 4294901760
      %526 = vmatmul.mubr.f32.gmra.mrb[0].mxu0 %v525
      %v527 = vpop.f32.mrb[0].mxu0
      %v528 = vadd.f32 %v354, %v527
      %v529 = vpop.f32.mrb[0].mxu0
      %530 = vmatprep.mubr.f32.mxu0 0.0
      %v531 = vand.u32 %v375, 4294901760
      %v532 = vsub.f32 %v375, %v531
      %v533 = vand.u32 %v532, 4294901760
      %v534 = vsub.f32 %v532, %v533
      %v535 = vand.u32 %v534, 4294901760
      %536 = vmatmul.mubr.f32.gmra.mrb[0].mxu0 %v535
      %v537 = vpop.f32.mrb[0].mxu0
      %v538 = vadd.f32 %v354, %v537
      %v539 = vpop.f32.mrb[0].mxu0
      %540 = vmatprep.mubr.f32.mxu0 0.0
      %v541 = vand.u32 %v378, 4294901760
      %v542 = vsub.f32 %v378, %v541
      %v543 = vand.u32 %v542, 4294901760
      %v544 = vsub.f32 %v542, %v543
      %v545 = vand.u32 %v544, 4294901760
      %546 = vmatmul.mubr.f32.gmra.mrb[0].mxu0 %v545
      %v547 = vpop.f32.mrb[0].mxu0
      %v548 = vadd.f32 %v354, %v547
      %v549 = vpop.f32.mrb[0].mxu0
      %550 = vmatprep.mubr.f32.mxu0 0.0
      %v551 = vand.u32 %v381, 4294901760
      %v552 = vsub.f32 %v381, %v551
      %v553 = vand.u32 %v552, 4294901760
      %v554 = vsub.f32 %v552, %v553
      %v555 = vand.u32 %v554, 4294901760
      %556 = vmatmul.mubr.f32.gmra.mrb[0].mxu0 %v555
      %v557 = vpop.f32.mrb[0].mxu0
      %v558 = vadd.f32 %v354, %v557
      %v559 = vpop.f32.mrb[0].mxu0
      %560 = vmatprep.mubr.f32.mxu0 0.0
      %v561 = vand.u32 %v384, 4294901760
      %v562 = vsub.f32 %v384, %v561
      %v563 = vand.u32 %v562, 4294901760
      %v564 = vsub.f32 %v562, %v563
      %v565 = vand.u32 %v564, 4294901760
      %566 = vmatmul.mubr.f32.gmra.mrb[0].mxu0 %v565
      %v567 = vpop.f32.mrb[0].mxu0
      %v568 = vadd.f32 %v354, %v567
      %v569 = vpop.f32.mrb[0].mxu0
      %570 = vmatprep.mubr.f32.mxu0 0.0
      %v571 = vand.u32 %v387, 4294901760
      %v572 = vsub.f32 %v387, %v571
      %v573 = vand.u32 %v572, 4294901760
      %v574 = vsub.f32 %v572, %v573
      %v575 = vand.u32 %v574, 4294901760
      %576 = vmatmul.mubr.f32.gmra.mrb[0].mxu0 %v575
      %v577 = vpop.f32.mrb[0].mxu0
      %v578 = vadd.f32 %v354, %v577
      %v579 = vpop.f32.mrb[0].mxu0
      %580 = vmatprep.mubr.f32.mxu0 0.0
      %v581 = vand.u32 %v390, 4294901760
      %v582 = vsub.f32 %v390, %v581
      %v583 = vand.u32 %v582, 4294901760
      %v584 = vsub.f32 %v582, %v583
      %v585 = vand.u32 %v584, 4294901760
      %586 = vmatmul.mubr.f32.gmra.mrb[0].mxu0 %v585
      %v587 = vpop.f32.mrb[0].mxu0
      %v588 = vadd.f32 %v354, %v587
      %v589 = vpop.f32.mrb[0].mxu0
      %590 = vmatprep.mubr.f32.mxu0 0.0
      %v591 = vand.u32 %v393, 4294901760
      %v592 = vsub.f32 %v393, %v591
      %v593 = vand.u32 %v592, 4294901760
      %v594 = vsub.f32 %v592, %v593
      %v595 = vand.u32 %v594, 4294901760
      %596 = vmatmul.mubr.f32.gmra.mrb[0].mxu0 %v595
      %v597 = vpop.f32.mrb[0].mxu0
      %v598 = vadd.f32 %v354, %v597
      %v599 = vpop.f32.mrb[0].mxu0
      %600 = vmatprep.mubr.f32.mxu0 0.0
      %v601 = vand.u32 %v396, 4294901760
      %v602 = vsub.f32 %v396, %v601
      %v603 = vand.u32 %v602, 4294901760
      %v604 = vsub.f32 %v602, %v603
      %v605 = vand.u32 %v604, 4294901760
      %606 = vmatmul.mubr.f32.gmra.mrb[0].mxu0 %v605
      %v607 = vpop.f32.mrb[0].mxu0
      %v608 = vadd.f32 %v354, %v607
      %v609 = vpop.f32.mrb[0].mxu0
      %610 = vmatprep.mubr.f32.mxu0 0.0
      %v611 = vand.u32 %v399, 4294901760
      %v612 = vsub.f32 %v399, %v611
      %v613 = vand.u32 %v612, 4294901760
      %v614 = vsub.f32 %v612, %v613
      %v615 = vand.u32 %v614, 4294901760
      %616 = vmatmul.mubr.f32.gmra.mrb[0].mxu0 %v615
      %v617 = vpop.f32.mrb[0].mxu0
      %v618 = vadd.f32 %v354, %v617
      %v619 = vpop.f32.mrb[0].mxu0
      %620 = vmatprep.mubr.f32.mxu0 0.0
      %v621 = vand.u32 %v402, 4294901760
      %v622 = vsub.f32 %v402, %v621
      %v623 = vand.u32 %v622, 4294901760
      %v624 = vsub.f32 %v622, %v623
      %v625 = vand.u32 %v624, 4294901760
      %626 = vmatmul.mubr.f32.gmra.mrb[0].mxu0 %v625
      %v627 = vpop.f32.mrb[0].mxu0
      %v628 = vadd.f32 %v354, %v627
      %v629 = vpop.f32.mrb[0].mxu0
      %630 = vdwg.mxu0
      %631 = vmatprep.subr.mxu0 0.0
      %v632 = vand.u32 %v347, 4294901760
      %v633 = vsub.f32 %v347, %v632
      %v634 = vand.u32 %v633, 4294901760
      %v635 = vsub.f32 %v633, %v634
      %v636 = vand.u32 %v635, 4294901760
      %637 = vmatpush1.msra.mxu0 %v636
      %638 = vmatprep.subr.mxu0 0.0
      %v639 = vand.u32 %v348, 4294901760
      %v640 = vsub.f32 %v348, %v639
      %v641 = vand.u32 %v640, 4294901760
      %v642 = vsub.f32 %v640, %v641
      %v643 = vand.u32 %v642, 4294901760
      %644 = vmatpush1.msra.mxu0 %v643
      %645 = vmatprep.subr.mxu0 0.0
      %646 = vmatpush1.msra.mxu0 0.0
      %647 = vmatprep.subr.mxu0 0.0
      %648 = vmatpush1.msra.mxu0 0.0
      %649 = vmatprep.subr.mxu0 0.0
      %650 = vmatpush1.msra.mxu0 0.0
      %651 = vmatprep.subr.mxu0 0.0
      %652 = vmatpush1.msra.mxu0 0.0
      %653 = vmatprep.subr.mxu0 0.0
      %654 = vmatpush1.msra.mxu0 0.0
      %655 = vmatprep.subr.mxu0 0.0
      %656 = vmatpush1.msra.mxu0 0.0
      %657 = vmatprep.subr.mxu0 0.0
      %658 = vmatpush1.msra.mxu0 0.0
      %659 = vmatprep.subr.mxu0 0.0
      %660 = vmatpush1.msra.mxu0 0.0
      %661 = vmatprep.subr.mxu0 0.0
      %662 = vmatpush1.msra.mxu0 0.0
      %663 = vmatprep.subr.mxu0 0.0
      %664 = vmatpush1.msra.mxu0 0.0
      %665 = vmatprep.subr.mxu0 0.0
      %666 = vmatpush1.msra.mxu0 0.0
      %667 = vmatprep.subr.mxu0 0.0
      %668 = vmatpush1.msra.mxu0 0.0
      %669 = vmatprep.subr.mxu0 0.0
      %670 = vmatpush1.msra.mxu0 0.0
      %671 = vmatprep.subr.mxu0 0.0
      %672 = vmatpush1.msra.mxu0 0.0
      %673 = vmatprep.subr.mxu0 0.0
      %674 = vmatpush1.msra.mxu0 0.0
      %675 = vmatprep.subr.mxu0 0.0
      %676 = vmatpush1.msra.mxu0 0.0
      %677 = vmatprep.subr.mxu0 0.0
      %678 = vmatpush1.msra.mxu0 0.0
      %679 = vmatprep.subr.mxu0 0.0
      %680 = vmatpush1.msra.mxu0 0.0
      %681 = vmatprep.subr.mxu0 0.0
      %682 = vmatpush1.msra.mxu0 0.0
      %683 = vmatprep.subr.mxu0 0.0
      %684 = vmatpush1.msra.mxu0 0.0
      %685 = vmatprep.subr.mxu0 0.0
      %686 = vmatpush1.msra.mxu0 0.0
      %687 = vmatprep.subr.mxu0 0.0
      %688 = vmatpush1.msra.mxu0 0.0
      %689 = vmatprep.subr.mxu0 0.0
      %690 = vmatpush1.msra.mxu0 0.0
      %691 = vmatprep.subr.mxu0 0.0
      %692 = vmatpush1.msra.mxu0 0.0
      %693 = vmatprep.subr.mxu0 0.0
      %694 = vmatpush1.msra.mxu0 0.0
      %695 = vmatprep.subr.mxu0 0.0
      %696 = vmatpush1.msra.mxu0 0.0
      %697 = vmatprep.subr.mxu0 0.0
      %698 = vmatpush1.msra.mxu0 0.0
      %699 = vmatprep.subr.mxu0 0.0
      %700 = vmatpush1.msra.mxu0 0.0
      %701 = vmatprep.subr.mxu0 0.0
      %702 = vmatpush1.msra.mxu0 0.0
      %703 = vmatprep.subr.mxu0 0.0
      %704 = vmatpush1.msra.mxu0 0.0
      %705 = vmatprep.mubr.f32.mxu0 0.0
      %v706 = vand.u32 %v357, 4294901760
      %707 = vmatmul.mubr.f32.gmra.mrb[0].mxu0 %v706
      %v708 = vpop.f32.mrb[0].mxu0
      %v709 = vadd.f32 %v478, %v708
      %v710 = vpop.f32.mrb[0].mxu0
      %711 = vmatprep.mubr.f32.mxu0 0.0
      %v712 = vand.u32 %v360, 4294901760
      %713 = vmatmul.mubr.f32.gmra.mrb[0].mxu0 %v712
      %v714 = vpop.f32.mrb[0].mxu0
      %v715 = vadd.f32 %v488, %v714
      %v716 = vpop.f32.mrb[0].mxu0
      %717 = vmatprep.mubr.f32.mxu0 0.0
      %v718 = vand.u32 %v363, 4294901760
      %719 = vmatmul.mubr.f32.gmra.mrb[0].mxu0 %v718
      %v720 = vpop.f32.mrb[0].mxu0
      %v721 = vadd.f32 %v498, %v720
      %v722 = vpop.f32.mrb[0].mxu0
      %723 = vmatprep.mubr.f32.mxu0 0.0
      %v724 = vand.u32 %v366, 4294901760
      %725 = vmatmul.mubr.f32.gmra.mrb[0].mxu0 %v724
      %v726 = vpop.f32.mrb[0].mxu0
      %v727 = vadd.f32 %v508, %v726
      %v728 = vpop.f32.mrb[0].mxu0
      %729 = vmatprep.mubr.f32.mxu0 0.0
      %v730 = vand.u32 %v369, 4294901760
      %731 = vmatmul.mubr.f32.gmra.mrb[0].mxu0 %v730
      %v732 = vpop.f32.mrb[0].mxu0
      %v733 = vadd.f32 %v518, %v732
      %v734 = vpop.f32.mrb[0].mxu0
      %735 = vmatprep.mubr.f32.mxu0 0.0
      %v736 = vand.u32 %v372, 4294901760
      %737 = vmatmul.mubr.f32.gmra.mrb[0].mxu0 %v736
      %v738 = vpop.f32.mrb[0].mxu0
      %v739 = vadd.f32 %v528, %v738
      %v740 = vpop.f32.mrb[0].mxu0
      %741 = vmatprep.mubr.f32.mxu0 0.0
      %v742 = vand.u32 %v375, 4294901760
      %743 = vmatmul.mubr.f32.gmra.mrb[0].mxu0 %v742
      %v744 = vpop.f32.mrb[0].mxu0
      %v745 = vadd.f32 %v538, %v744
      %v746 = vpop.f32.mrb[0].mxu0
      %747 = vmatprep.mubr.f32.mxu0 0.0
      %v748 = vand.u32 %v378, 4294901760
      %749 = vmatmul.mubr.f32.gmra.mrb[0].mxu0 %v748
      %v750 = vpop.f32.mrb[0].mxu0
      %v751 = vadd.f32 %v548, %v750
      %v752 = vpop.f32.mrb[0].mxu0
      %753 = vmatprep.mubr.f32.mxu0 0.0
      %v754 = vand.u32 %v381, 4294901760
      %755 = vmatmul.mubr.f32.gmra.mrb[0].mxu0 %v754
      %v756 = vpop.f32.mrb[0].mxu0
      %v757 = vadd.f32 %v558, %v756
      %v758 = vpop.f32.mrb[0].mxu0
      %759 = vmatprep.mubr.f32.mxu0 0.0
      %v760 = vand.u32 %v384, 4294901760
      %761 = vmatmul.mubr.f32.gmra.mrb[0].mxu0 %v760
      %v762 = vpop.f32.mrb[0].mxu0
      %v763 = vadd.f32 %v568, %v762
      %v764 = vpop.f32.mrb[0].mxu0
      %765 = vmatprep.mubr.f32.mxu0 0.0
      %v766 = vand.u32 %v387, 4294901760
      %767 = vmatmul.mubr.f32.gmra.mrb[0].mxu0 %v766
      %v768 = vpop.f32.mrb[0].mxu0
      %v769 = vadd.f32 %v578, %v768
      %v770 = vpop.f32.mrb[0].mxu0
      %771 = vmatprep.mubr.f32.mxu0 0.0
      %v772 = vand.u32 %v390, 4294901760
      %773 = vmatmul.mubr.f32.gmra.mrb[0].mxu0 %v772
      %v774 = vpop.f32.mrb[0].mxu0
      %v775 = vadd.f32 %v588, %v774
      %v776 = vpop.f32.mrb[0].mxu0
      %777 = vmatprep.mubr.f32.mxu0 0.0
      %v778 = vand.u32 %v393, 4294901760
      %779 = vmatmul.mubr.f32.gmra.mrb[0].mxu0 %v778
      %v780 = vpop.f32.mrb[0].mxu0
      %v781 = vadd.f32 %v598, %v780
      %v782 = vpop.f32.mrb[0].mxu0
      %783 = vmatprep.mubr.f32.mxu0 0.0
      %v784 = vand.u32 %v396, 4294901760
      %785 = vmatmul.mubr.f32.gmra.mrb[0].mxu0 %v784
      %v786 = vpop.f32.mrb[0].mxu0
      %v787 = vadd.f32 %v608, %v786
      %v788 = vpop.f32.mrb[0].mxu0
      %789 = vmatprep.mubr.f32.mxu0 0.0
      %v790 = vand.u32 %v399, 4294901760
      %791 = vmatmul.mubr.f32.gmra.mrb[0].mxu0 %v790
      %v792 = vpop.f32.mrb[0].mxu0
      %v793 = vadd.f32 %v618, %v792
      %v794 = vpop.f32.mrb[0].mxu0
      %795 = vmatprep.mubr.f32.mxu0 0.0
      %v796 = vand.u32 %v402, 4294901760
      %797 = vmatmul.mubr.f32.gmra.mrb[0].mxu0 %v796
      %v798 = vpop.f32.mrb[0].mxu0
      %v799 = vadd.f32 %v628, %v798
      %v800 = vpop.f32.mrb[0].mxu0
      %801 = vdwg.mxu0
      %802 = vmatprep.subr.mxu0 0.0
      %v803 = vand.u32 %v347, 4294901760
      %v804 = vsub.f32 %v347, %v803
      %805 = vmatpush1.msra.mxu0 %v804
      %806 = vmatprep.subr.mxu0 0.0
      %v807 = vand.u32 %v348, 4294901760
      %v808 = vsub.f32 %v348, %v807
      %809 = vmatpush1.msra.mxu0 %v808
      %810 = vmatprep.subr.mxu0 0.0
      %811 = vmatpush1.msra.mxu0 0.0
      %812 = vmatprep.subr.mxu0 0.0
      %813 = vmatpush1.msra.mxu0 0.0
      %814 = vmatprep.subr.mxu0 0.0
      %815 = vmatpush1.msra.mxu0 0.0
      %816 = vmatprep.subr.mxu0 0.0
      %817 = vmatpush1.msra.mxu0 0.0
      %818 = vmatprep.subr.mxu0 0.0
      %819 = vmatpush1.msra.mxu0 0.0
      %820 = vmatprep.subr.mxu0 0.0
      %821 = vmatpush1.msra.mxu0 0.0
      %822 = vmatprep.subr.mxu0 0.0
      %823 = vmatpush1.msra.mxu0 0.0
      %824 = vmatprep.subr.mxu0 0.0
      %825 = vmatpush1.msra.mxu0 0.0
      %826 = vmatprep.subr.mxu0 0.0
      %827 = vmatpush1.msra.mxu0 0.0
      %828 = vmatprep.subr.mxu0 0.0
      %829 = vmatpush1.msra.mxu0 0.0
      %830 = vmatprep.subr.mxu0 0.0
      %831 = vmatpush1.msra.mxu0 0.0
      %832 = vmatprep.subr.mxu0 0.0
      %833 = vmatpush1.msra.mxu0 0.0
      %834 = vmatprep.subr.mxu0 0.0
      %835 = vmatpush1.msra.mxu0 0.0
      %836 = vmatprep.subr.mxu0 0.0
      %837 = vmatpush1.msra.mxu0 0.0
      %838 = vmatprep.subr.mxu0 0.0
      %839 = vmatpush1.msra.mxu0 0.0
      %840 = vmatprep.subr.mxu0 0.0
      %841 = vmatpush1.msra.mxu0 0.0
      %842 = vmatprep.subr.mxu0 0.0
      %843 = vmatpush1.msra.mxu0 0.0
      %844 = vmatprep.subr.mxu0 0.0
      %845 = vmatpush1.msra.mxu0 0.0
      %846 = vmatprep.subr.mxu0 0.0
      %847 = vmatpush1.msra.mxu0 0.0
      %848 = vmatprep.subr.mxu0 0.0
      %849 = vmatpush1.msra.mxu0 0.0
      %850 = vmatprep.subr.mxu0 0.0
      %851 = vmatpush1.msra.mxu0 0.0
      %852 = vmatprep.subr.mxu0 0.0
      %853 = vmatpush1.msra.mxu0 0.0
      %854 = vmatprep.subr.mxu0 0.0
      %855 = vmatpush1.msra.mxu0 0.0
      %856 = vmatprep.subr.mxu0 0.0
      %857 = vmatpush1.msra.mxu0 0.0
      %858 = vmatprep.subr.mxu0 0.0
      %859 = vmatpush1.msra.mxu0 0.0
      %860 = vmatprep.subr.mxu0 0.0
      %861 = vmatpush1.msra.mxu0 0.0
      %862 = vmatprep.subr.mxu0 0.0
      %863 = vmatpush1.msra.mxu0 0.0
      %864 = vmatprep.subr.mxu0 0.0
      %865 = vmatpush1.msra.mxu0 0.0
      %866 = vmatprep.subr.mxu0 0.0
      %867 = vmatpush1.msra.mxu0 0.0
      %868 = vmatprep.subr.mxu0 0.0
      %869 = vmatpush1.msra.mxu0 0.0
      %870 = vmatprep.mubr.f32.mxu0 0.0
      %v871 = vand.u32 %v357, 4294901760
      %v872 = vsub.f32 %v357, %v871
      %873 = vmatmul.mubr.f32.gmra.mrb[0].mxu0 %v872
      %v874 = vpop.f32.mrb[0].mxu0
      %v875 = vadd.f32 %v709, %v874
      %v876 = vpop.f32.mrb[0].mxu0
      %877 = vmatprep.mubr.f32.mxu0 0.0
      %v878 = vand.u32 %v360, 4294901760
      %v879 = vsub.f32 %v360, %v878
      %880 = vmatmul.mubr.f32.gmra.mrb[0].mxu0 %v879
      %v881 = vpop.f32.mrb[0].mxu0
      %v882 = vadd.f32 %v715, %v881
      %v883 = vpop.f32.mrb[0].mxu0
      %884 = vmatprep.mubr.f32.mxu0 0.0
      %v885 = vand.u32 %v363, 4294901760
      %v886 = vsub.f32 %v363, %v885
      %887 = vmatmul.mubr.f32.gmra.mrb[0].mxu0 %v886
      %v888 = vpop.f32.mrb[0].mxu0
      %v889 = vadd.f32 %v721, %v888
      %v890 = vpop.f32.mrb[0].mxu0
      %891 = vmatprep.mubr.f32.mxu0 0.0
      %v892 = vand.u32 %v366, 4294901760
      %v893 = vsub.f32 %v366, %v892
      %894 = vmatmul.mubr.f32.gmra.mrb[0].mxu0 %v893
      %v895 = vpop.f32.mrb[0].mxu0
      %v896 = vadd.f32 %v727, %v895
      %v897 = vpop.f32.mrb[0].mxu0
      %898 = vmatprep.mubr.f32.mxu0 0.0
      %v899 = vand.u32 %v369, 4294901760
      %v900 = vsub.f32 %v369, %v899
      %901 = vmatmul.mubr.f32.gmra.mrb[0].mxu0 %v900
      %v902 = vpop.f32.mrb[0].mxu0
      %v903 = vadd.f32 %v733, %v902
      %v904 = vpop.f32.mrb[0].mxu0
      %905 = vmatprep.mubr.f32.mxu0 0.0
      %v906 = vand.u32 %v372, 4294901760
      %v907 = vsub.f32 %v372, %v906
      %908 = vmatmul.mubr.f32.gmra.mrb[0].mxu0 %v907
      %v909 = vpop.f32.mrb[0].mxu0
      %v910 = vadd.f32 %v739, %v909
      %v911 = vpop.f32.mrb[0].mxu0
      %912 = vmatprep.mubr.f32.mxu0 0.0
      %v913 = vand.u32 %v375, 4294901760
      %v914 = vsub.f32 %v375, %v913
      %915 = vmatmul.mubr.f32.gmra.mrb[0].mxu0 %v914
      %v916 = vpop.f32.mrb[0].mxu0
      %v917 = vadd.f32 %v745, %v916
      %v918 = vpop.f32.mrb[0].mxu0
      %919 = vmatprep.mubr.f32.mxu0 0.0
      %v920 = vand.u32 %v378, 4294901760
      %v921 = vsub.f32 %v378, %v920
      %922 = vmatmul.mubr.f32.gmra.mrb[0].mxu0 %v921
      %v923 = vpop.f32.mrb[0].mxu0
      %v924 = vadd.f32 %v751, %v923
      %v925 = vpop.f32.mrb[0].mxu0
      %926 = vmatprep.mubr.f32.mxu0 0.0
      %v927 = vand.u32 %v381, 4294901760
      %v928 = vsub.f32 %v381, %v927
      %929 = vmatmul.mubr.f32.gmra.mrb[0].mxu0 %v928
      %v930 = vpop.f32.mrb[0].mxu0
      %v931 = vadd.f32 %v757, %v930
      %v932 = vpop.f32.mrb[0].mxu0
      %933 = vmatprep.mubr.f32.mxu0 0.0
      %v934 = vand.u32 %v384, 4294901760
      %v935 = vsub.f32 %v384, %v934
      %936 = vmatmul.mubr.f32.gmra.mrb[0].mxu0 %v935
      %v937 = vpop.f32.mrb[0].mxu0
      %v938 = vadd.f32 %v763, %v937
      %v939 = vpop.f32.mrb[0].mxu0
      %940 = vmatprep.mubr.f32.mxu0 0.0
      %v941 = vand.u32 %v387, 4294901760
      %v942 = vsub.f32 %v387, %v941
      %943 = vmatmul.mubr.f32.gmra.mrb[0].mxu0 %v942
      %v944 = vpop.f32.mrb[0].mxu0
      %v945 = vadd.f32 %v769, %v944
      %v946 = vpop.f32.mrb[0].mxu0
      %947 = vmatprep.mubr.f32.mxu0 0.0
      %v948 = vand.u32 %v390, 4294901760
      %v949 = vsub.f32 %v390, %v948
      %950 = vmatmul.mubr.f32.gmra.mrb[0].mxu0 %v949
      %v951 = vpop.f32.mrb[0].mxu0
      %v952 = vadd.f32 %v775, %v951
      %v953 = vpop.f32.mrb[0].mxu0
      %954 = vmatprep.mubr.f32.mxu0 0.0
      %v955 = vand.u32 %v393, 4294901760
      %v956 = vsub.f32 %v393, %v955
      %957 = vmatmul.mubr.f32.gmra.mrb[0].mxu0 %v956
      %v958 = vpop.f32.mrb[0].mxu0
      %v959 = vadd.f32 %v781, %v958
      %v960 = vpop.f32.mrb[0].mxu0
      %961 = vmatprep.mubr.f32.mxu0 0.0
      %v962 = vand.u32 %v396, 4294901760
      %v963 = vsub.f32 %v396, %v962
      %964 = vmatmul.mubr.f32.gmra.mrb[0].mxu0 %v963
      %v965 = vpop.f32.mrb[0].mxu0
      %v966 = vadd.f32 %v787, %v965
      %v967 = vpop.f32.mrb[0].mxu0
      %968 = vmatprep.mubr.f32.mxu0 0.0
      %v969 = vand.u32 %v399, 4294901760
      %v970 = vsub.f32 %v399, %v969
      %971 = vmatmul.mubr.f32.gmra.mrb[0].mxu0 %v970
      %v972 = vpop.f32.mrb[0].mxu0
      %v973 = vadd.f32 %v793, %v972
      %v974 = vpop.f32.mrb[0].mxu0
      %975 = vmatprep.mubr.f32.mxu0 0.0
      %v976 = vand.u32 %v402, 4294901760
      %v977 = vsub.f32 %v402, %v976
      %978 = vmatmul.mubr.f32.gmra.mrb[0].mxu0 %v977
      %v979 = vpop.f32.mrb[0].mxu0
      %v980 = vadd.f32 %v799, %v979
      %v981 = vpop.f32.mrb[0].mxu0
      %982 = vdwg.mxu0
      %983 = vmatprep.subr.mxu0 0.0
      %v984 = vand.u32 %v347, 4294901760
      %985 = vmatpush1.msra.mxu0 %v984
      %986 = vmatprep.subr.mxu0 0.0
      %v987 = vand.u32 %v348, 4294901760
      %988 = vmatpush1.msra.mxu0 %v987
      %989 = vmatprep.subr.mxu0 0.0
      %990 = vmatpush1.msra.mxu0 0.0
      %991 = vmatprep.subr.mxu0 0.0
      %992 = vmatpush1.msra.mxu0 0.0
      %993 = vmatprep.subr.mxu0 0.0
      %994 = vmatpush1.msra.mxu0 0.0
      %995 = vmatprep.subr.mxu0 0.0
      %996 = vmatpush1.msra.mxu0 0.0
      %997 = vmatprep.subr.mxu0 0.0
      %998 = vmatpush1.msra.mxu0 0.0
      %999 = vmatprep.subr.mxu0 0.0
      %1000 = vmatpush1.msra.mxu0 0.0
      %1001 = vmatprep.subr.mxu0 0.0
      %1002 = vmatpush1.msra.mxu0 0.0
      %1003 = vmatprep.subr.mxu0 0.0
      %1004 = vmatpush1.msra.mxu0 0.0
      %1005 = vmatprep.subr.mxu0 0.0
      %1006 = vmatpush1.msra.mxu0 0.0
      %1007 = vmatprep.subr.mxu0 0.0
      %1008 = vmatpush1.msra.mxu0 0.0
      %1009 = vmatprep.subr.mxu0 0.0
      %1010 = vmatpush1.msra.mxu0 0.0
      %1011 = vmatprep.subr.mxu0 0.0
      %1012 = vmatpush1.msra.mxu0 0.0
      %1013 = vmatprep.subr.mxu0 0.0
      %1014 = vmatpush1.msra.mxu0 0.0
      %1015 = vmatprep.subr.mxu0 0.0
      %1016 = vmatpush1.msra.mxu0 0.0
      %1017 = vmatprep.subr.mxu0 0.0
      %1018 = vmatpush1.msra.mxu0 0.0
      %1019 = vmatprep.subr.mxu0 0.0
      %1020 = vmatpush1.msra.mxu0 0.0
      %1021 = vmatprep.subr.mxu0 0.0
      %1022 = vmatpush1.msra.mxu0 0.0
      %1023 = vmatprep.subr.mxu0 0.0
      %1024 = vmatpush1.msra.mxu0 0.0
      %1025 = vmatprep.subr.mxu0 0.0
      %1026 = vmatpush1.msra.mxu0 0.0
      %1027 = vmatprep.subr.mxu0 0.0
      %1028 = vmatpush1.msra.mxu0 0.0
      %1029 = vmatprep.subr.mxu0 0.0
      %1030 = vmatpush1.msra.mxu0 0.0
      %1031 = vmatprep.subr.mxu0 0.0
      %1032 = vmatpush1.msra.mxu0 0.0
      %1033 = vmatprep.subr.mxu0 0.0
      %1034 = vmatpush1.msra.mxu0 0.0
      %1035 = vmatprep.subr.mxu0 0.0
      %1036 = vmatpush1.msra.mxu0 0.0
      %1037 = vmatprep.subr.mxu0 0.0
      %1038 = vmatpush1.msra.mxu0 0.0
      %1039 = vmatprep.subr.mxu0 0.0
      %1040 = vmatpush1.msra.mxu0 0.0
      %1041 = vmatprep.subr.mxu0 0.0
      %1042 = vmatpush1.msra.mxu0 0.0
      %1043 = vmatprep.subr.mxu0 0.0
      %1044 = vmatpush1.msra.mxu0 0.0
      %1045 = vmatprep.subr.mxu0 0.0
      %1046 = vmatpush1.msra.mxu0 0.0
      %1047 = vmatprep.subr.mxu0 0.0
      %1048 = vmatpush1.msra.mxu0 0.0
      %1049 = vmatprep.mubr.f32.mxu0 0.0
      %v1050 = vand.u32 %v357, 4294901760
      %v1051 = vsub.f32 %v357, %v1050
      %v1052 = vand.u32 %v1051, 4294901760
      %1053 = vmatmul.mubr.f32.gmra.mrb[0].mxu0 %v1052
      %v1054 = vpop.f32.mrb[0].mxu0
      %v1055 = vadd.f32 %v875, %v1054
      %v1056 = vpop.f32.mrb[0].mxu0
      %1057 = vmatprep.mubr.f32.mxu0 0.0
      %v1058 = vand.u32 %v360, 4294901760
      %v1059 = vsub.f32 %v360, %v1058
      %v1060 = vand.u32 %v1059, 4294901760
      %1061 = vmatmul.mubr.f32.gmra.mrb[0].mxu0 %v1060
      %v1062 = vpop.f32.mrb[0].mxu0
      %v1063 = vadd.f32 %v882, %v1062
      %v1064 = vpop.f32.mrb[0].mxu0
      %1065 = vmatprep.mubr.f32.mxu0 0.0
      %v1066 = vand.u32 %v363, 4294901760
      %v1067 = vsub.f32 %v363, %v1066
      %v1068 = vand.u32 %v1067, 4294901760
      %1069 = vmatmul.mubr.f32.gmra.mrb[0].mxu0 %v1068
      %v1070 = vpop.f32.mrb[0].mxu0
      %v1071 = vadd.f32 %v889, %v1070
      %v1072 = vpop.f32.mrb[0].mxu0
      %1073 = vmatprep.mubr.f32.mxu0 0.0
      %v1074 = vand.u32 %v366, 4294901760
      %v1075 = vsub.f32 %v366, %v1074
      %v1076 = vand.u32 %v1075, 4294901760
      %1077 = vmatmul.mubr.f32.gmra.mrb[0].mxu0 %v1076
      %v1078 = vpop.f32.mrb[0].mxu0
      %v1079 = vadd.f32 %v896, %v1078
      %v1080 = vpop.f32.mrb[0].mxu0
      %1081 = vmatprep.mubr.f32.mxu0 0.0
      %v1082 = vand.u32 %v369, 4294901760
      %v1083 = vsub.f32 %v369, %v1082
      %v1084 = vand.u32 %v1083, 4294901760
      %1085 = vmatmul.mubr.f32.gmra.mrb[0].mxu0 %v1084
      %v1086 = vpop.f32.mrb[0].mxu0
      %v1087 = vadd.f32 %v903, %v1086
      %v1088 = vpop.f32.mrb[0].mxu0
      %1089 = vmatprep.mubr.f32.mxu0 0.0
      %v1090 = vand.u32 %v372, 4294901760
      %v1091 = vsub.f32 %v372, %v1090
      %v1092 = vand.u32 %v1091, 4294901760
      %1093 = vmatmul.mubr.f32.gmra.mrb[0].mxu0 %v1092
      %v1094 = vpop.f32.mrb[0].mxu0
      %v1095 = vadd.f32 %v910, %v1094
      %v1096 = vpop.f32.mrb[0].mxu0
      %1097 = vmatprep.mubr.f32.mxu0 0.0
      %v1098 = vand.u32 %v375, 4294901760
      %v1099 = vsub.f32 %v375, %v1098
      %v1100 = vand.u32 %v1099, 4294901760
      %1101 = vmatmul.mubr.f32.gmra.mrb[0].mxu0 %v1100
      %v1102 = vpop.f32.mrb[0].mxu0
      %v1103 = vadd.f32 %v917, %v1102
      %v1104 = vpop.f32.mrb[0].mxu0
      %1105 = vmatprep.mubr.f32.mxu0 0.0
      %v1106 = vand.u32 %v378, 4294901760
      %v1107 = vsub.f32 %v378, %v1106
      %v1108 = vand.u32 %v1107, 4294901760
      %1109 = vmatmul.mubr.f32.gmra.mrb[0].mxu0 %v1108
      %v1110 = vpop.f32.mrb[0].mxu0
      %v1111 = vadd.f32 %v924, %v1110
      %v1112 = vpop.f32.mrb[0].mxu0
      %1113 = vmatprep.mubr.f32.mxu0 0.0
      %v1114 = vand.u32 %v381, 4294901760
      %v1115 = vsub.f32 %v381, %v1114
      %v1116 = vand.u32 %v1115, 4294901760
      %1117 = vmatmul.mubr.f32.gmra.mrb[0].mxu0 %v1116
      %v1118 = vpop.f32.mrb[0].mxu0
      %v1119 = vadd.f32 %v931, %v1118
      %v1120 = vpop.f32.mrb[0].mxu0
      %1121 = vmatprep.mubr.f32.mxu0 0.0
      %v1122 = vand.u32 %v384, 4294901760
      %v1123 = vsub.f32 %v384, %v1122
      %v1124 = vand.u32 %v1123, 4294901760
      %1125 = vmatmul.mubr.f32.gmra.mrb[0].mxu0 %v1124
      %v1126 = vpop.f32.mrb[0].mxu0
      %v1127 = vadd.f32 %v938, %v1126
      %v1128 = vpop.f32.mrb[0].mxu0
      %1129 = vmatprep.mubr.f32.mxu0 0.0
      %v1130 = vand.u32 %v387, 4294901760
      %v1131 = vsub.f32 %v387, %v1130
      %v1132 = vand.u32 %v1131, 4294901760
      %1133 = vmatmul.mubr.f32.gmra.mrb[0].mxu0 %v1132
      %v1134 = vpop.f32.mrb[0].mxu0
      %v1135 = vadd.f32 %v945, %v1134
      %v1136 = vpop.f32.mrb[0].mxu0
      %1137 = vmatprep.mubr.f32.mxu0 0.0
      %v1138 = vand.u32 %v390, 4294901760
      %v1139 = vsub.f32 %v390, %v1138
      %v1140 = vand.u32 %v1139, 4294901760
      %1141 = vmatmul.mubr.f32.gmra.mrb[0].mxu0 %v1140
      %v1142 = vpop.f32.mrb[0].mxu0
      %v1143 = vadd.f32 %v952, %v1142
      %v1144 = vpop.f32.mrb[0].mxu0
      %1145 = vmatprep.mubr.f32.mxu0 0.0
      %v1146 = vand.u32 %v393, 4294901760
      %v1147 = vsub.f32 %v393, %v1146
      %v1148 = vand.u32 %v1147, 4294901760
      %1149 = vmatmul.mubr.f32.gmra.mrb[0].mxu0 %v1148
      %v1150 = vpop.f32.mrb[0].mxu0
      %v1151 = vadd.f32 %v959, %v1150
      %v1152 = vpop.f32.mrb[0].mxu0
      %1153 = vmatprep.mubr.f32.mxu0 0.0
      %v1154 = vand.u32 %v396, 4294901760
      %v1155 = vsub.f32 %v396, %v1154
      %v1156 = vand.u32 %v1155, 4294901760
      %1157 = vmatmul.mubr.f32.gmra.mrb[0].mxu0 %v1156
      %v1158 = vpop.f32.mrb[0].mxu0
      %v1159 = vadd.f32 %v966, %v1158
      %v1160 = vpop.f32.mrb[0].mxu0
      %1161 = vmatprep.mubr.f32.mxu0 0.0
      %v1162 = vand.u32 %v399, 4294901760
      %v1163 = vsub.f32 %v399, %v1162
      %v1164 = vand.u32 %v1163, 4294901760
      %1165 = vmatmul.mubr.f32.gmra.mrb[0].mxu0 %v1164
      %v1166 = vpop.f32.mrb[0].mxu0
      %v1167 = vadd.f32 %v973, %v1166
      %v1168 = vpop.f32.mrb[0].mxu0
      %1169 = vmatprep.mubr.f32.mxu0 0.0
      %v1170 = vand.u32 %v402, 4294901760
      %v1171 = vsub.f32 %v402, %v1170
      %v1172 = vand.u32 %v1171, 4294901760
      %1173 = vmatmul.mubr.f32.gmra.mrb[0].mxu0 %v1172
      %v1174 = vpop.f32.mrb[0].mxu0
      %v1175 = vadd.f32 %v980, %v1174
      %v1176 = vpop.f32.mrb[0].mxu0
      %1177 = vdwg.mxu0
      %1178 = vmatprep.subr.mxu0 0.0
      %v1179 = vand.u32 %v347, 4294901760
      %v1180 = vsub.f32 %v347, %v1179
      %v1181 = vand.u32 %v1180, 4294901760
      %1182 = vmatpush1.msra.mxu0 %v1181
      %1183 = vmatprep.subr.mxu0 0.0
      %v1184 = vand.u32 %v348, 4294901760
      %v1185 = vsub.f32 %v348, %v1184
      %v1186 = vand.u32 %v1185, 4294901760
      %1187 = vmatpush1.msra.mxu0 %v1186
      %1188 = vmatprep.subr.mxu0 0.0
      %1189 = vmatpush1.msra.mxu0 0.0
      %1190 = vmatprep.subr.mxu0 0.0
      %1191 = vmatpush1.msra.mxu0 0.0
      %1192 = vmatprep.subr.mxu0 0.0
      %1193 = vmatpush1.msra.mxu0 0.0
      %1194 = vmatprep.subr.mxu0 0.0
      %1195 = vmatpush1.msra.mxu0 0.0
      %1196 = vmatprep.subr.mxu0 0.0
      %1197 = vmatpush1.msra.mxu0 0.0
      %1198 = vmatprep.subr.mxu0 0.0
      %1199 = vmatpush1.msra.mxu0 0.0
      %1200 = vmatprep.subr.mxu0 0.0
      %1201 = vmatpush1.msra.mxu0 0.0
      %1202 = vmatprep.subr.mxu0 0.0
      %1203 = vmatpush1.msra.mxu0 0.0
      %1204 = vmatprep.subr.mxu0 0.0
      %1205 = vmatpush1.msra.mxu0 0.0
      %1206 = vmatprep.subr.mxu0 0.0
      %1207 = vmatpush1.msra.mxu0 0.0
      %1208 = vmatprep.subr.mxu0 0.0
      %1209 = vmatpush1.msra.mxu0 0.0
      %1210 = vmatprep.subr.mxu0 0.0
      %1211 = vmatpush1.msra.mxu0 0.0
      %1212 = vmatprep.subr.mxu0 0.0
      %1213 = vmatpush1.msra.mxu0 0.0
      %1214 = vmatprep.subr.mxu0 0.0
      %1215 = vmatpush1.msra.mxu0 0.0
      %1216 = vmatprep.subr.mxu0 0.0
      %1217 = vmatpush1.msra.mxu0 0.0
      %1218 = vmatprep.subr.mxu0 0.0
      %1219 = vmatpush1.msra.mxu0 0.0
      %1220 = vmatprep.subr.mxu0 0.0
      %1221 = vmatpush1.msra.mxu0 0.0
      %1222 = vmatprep.subr.mxu0 0.0
      %1223 = vmatpush1.msra.mxu0 0.0
      %1224 = vmatprep.subr.mxu0 0.0
      %1225 = vmatpush1.msra.mxu0 0.0
      %1226 = vmatprep.subr.mxu0 0.0
      %1227 = vmatpush1.msra.mxu0 0.0
      %1228 = vmatprep.subr.mxu0 0.0
      %1229 = vmatpush1.msra.mxu0 0.0
      %1230 = vmatprep.subr.mxu0 0.0
      %1231 = vmatpush1.msra.mxu0 0.0
      %1232 = vmatprep.subr.mxu0 0.0
      %1233 = vmatpush1.msra.mxu0 0.0
      %1234 = vmatprep.subr.mxu0 0.0
      %1235 = vmatpush1.msra.mxu0 0.0
      %1236 = vmatprep.subr.mxu0 0.0
      %1237 = vmatpush1.msra.mxu0 0.0
      %1238 = vmatprep.subr.mxu0 0.0
      %1239 = vmatpush1.msra.mxu0 0.0
      %1240 = vmatprep.subr.mxu0 0.0
      %1241 = vmatpush1.msra.mxu0 0.0
      %1242 = vmatprep.subr.mxu0 0.0
      %1243 = vmatpush1.msra.mxu0 0.0
      %1244 = vmatprep.subr.mxu0 0.0
      %1245 = vmatpush1.msra.mxu0 0.0
      %1246 = vmatprep.subr.mxu0 0.0
      %1247 = vmatpush1.msra.mxu0 0.0
      %1248 = vmatprep.mubr.f32.mxu0 0.0
      %v1249 = vand.u32 %v357, 4294901760
      %1250 = vmatmul.mubr.f32.gmra.mrb[0].mxu0 %v1249
      %v1251 = vpop.f32.mrb[0].mxu0
      %v1252 = vadd.f32 %v1055, %v1251
      %v1253 = vpop.f32.mrb[0].mxu0
      %1254 = vmatprep.mubr.f32.mxu0 0.0
      %v1255 = vand.u32 %v360, 4294901760
      %1256 = vmatmul.mubr.f32.gmra.mrb[0].mxu0 %v1255
      %v1257 = vpop.f32.mrb[0].mxu0
      %v1258 = vadd.f32 %v1063, %v1257
      %v1259 = vpop.f32.mrb[0].mxu0
      %1260 = vmatprep.mubr.f32.mxu0 0.0
      %v1261 = vand.u32 %v363, 4294901760
      %1262 = vmatmul.mubr.f32.gmra.mrb[0].mxu0 %v1261
      %v1263 = vpop.f32.mrb[0].mxu0
      %v1264 = vadd.f32 %v1071, %v1263
      %v1265 = vpop.f32.mrb[0].mxu0
      %1266 = vmatprep.mubr.f32.mxu0 0.0
      %v1267 = vand.u32 %v366, 4294901760
      %1268 = vmatmul.mubr.f32.gmra.mrb[0].mxu0 %v1267
      %v1269 = vpop.f32.mrb[0].mxu0
      %v1270 = vadd.f32 %v1079, %v1269
      %v1271 = vpop.f32.mrb[0].mxu0
      %1272 = vmatprep.mubr.f32.mxu0 0.0
      %v1273 = vand.u32 %v369, 4294901760
      %1274 = vmatmul.mubr.f32.gmra.mrb[0].mxu0 %v1273
      %v1275 = vpop.f32.mrb[0].mxu0
      %v1276 = vadd.f32 %v1087, %v1275
      %v1277 = vpop.f32.mrb[0].mxu0
      %1278 = vmatprep.mubr.f32.mxu0 0.0
      %v1279 = vand.u32 %v372, 4294901760
      %1280 = vmatmul.mubr.f32.gmra.mrb[0].mxu0 %v1279
      %v1281 = vpop.f32.mrb[0].mxu0
      %v1282 = vadd.f32 %v1095, %v1281
      %v1283 = vpop.f32.mrb[0].mxu0
      %1284 = vmatprep.mubr.f32.mxu0 0.0
      %v1285 = vand.u32 %v375, 4294901760
      %1286 = vmatmul.mubr.f32.gmra.mrb[0].mxu0 %v1285
      %v1287 = vpop.f32.mrb[0].mxu0
      %v1288 = vadd.f32 %v1103, %v1287
      %v1289 = vpop.f32.mrb[0].mxu0
      %1290 = vmatprep.mubr.f32.mxu0 0.0
      %v1291 = vand.u32 %v378, 4294901760
      %1292 = vmatmul.mubr.f32.gmra.mrb[0].mxu0 %v1291
      %v1293 = vpop.f32.mrb[0].mxu0
      %v1294 = vadd.f32 %v1111, %v1293
      %v1295 = vpop.f32.mrb[0].mxu0
      %1296 = vmatprep.mubr.f32.mxu0 0.0
      %v1297 = vand.u32 %v381, 4294901760
      %1298 = vmatmul.mubr.f32.gmra.mrb[0].mxu0 %v1297
      %v1299 = vpop.f32.mrb[0].mxu0
      %v1300 = vadd.f32 %v1119, %v1299
      %v1301 = vpop.f32.mrb[0].mxu0
      %1302 = vmatprep.mubr.f32.mxu0 0.0
      %v1303 = vand.u32 %v384, 4294901760
      %1304 = vmatmul.mubr.f32.gmra.mrb[0].mxu0 %v1303
      %v1305 = vpop.f32.mrb[0].mxu0
      %v1306 = vadd.f32 %v1127, %v1305
      %v1307 = vpop.f32.mrb[0].mxu0
      %1308 = vmatprep.mubr.f32.mxu0 0.0
      %v1309 = vand.u32 %v387, 4294901760
      %1310 = vmatmul.mubr.f32.gmra.mrb[0].mxu0 %v1309
      %v1311 = vpop.f32.mrb[0].mxu0
      %v1312 = vadd.f32 %v1135, %v1311
      %v1313 = vpop.f32.mrb[0].mxu0
      %1314 = vmatprep.mubr.f32.mxu0 0.0
      %v1315 = vand.u32 %v390, 4294901760
      %1316 = vmatmul.mubr.f32.gmra.mrb[0].mxu0 %v1315
      %v1317 = vpop.f32.mrb[0].mxu0
      %v1318 = vadd.f32 %v1143, %v1317
      %v1319 = vpop.f32.mrb[0].mxu0
      %1320 = vmatprep.mubr.f32.mxu0 0.0
      %v1321 = vand.u32 %v393, 4294901760
      %1322 = vmatmul.mubr.f32.gmra.mrb[0].mxu0 %v1321
      %v1323 = vpop.f32.mrb[0].mxu0
      %v1324 = vadd.f32 %v1151, %v1323
      %v1325 = vpop.f32.mrb[0].mxu0
      %1326 = vmatprep.mubr.f32.mxu0 0.0
      %v1327 = vand.u32 %v396, 4294901760
      %1328 = vmatmul.mubr.f32.gmra.mrb[0].mxu0 %v1327
      %v1329 = vpop.f32.mrb[0].mxu0
      %v1330 = vadd.f32 %v1159, %v1329
      %v1331 = vpop.f32.mrb[0].mxu0
      %1332 = vmatprep.mubr.f32.mxu0 0.0
      %v1333 = vand.u32 %v399, 4294901760
      %1334 = vmatmul.mubr.f32.gmra.mrb[0].mxu0 %v1333
      %v1335 = vpop.f32.mrb[0].mxu0
      %v1336 = vadd.f32 %v1167, %v1335
      %v1337 = vpop.f32.mrb[0].mxu0
      %1338 = vmatprep.mubr.f32.mxu0 0.0
      %v1339 = vand.u32 %v402, 4294901760
      %1340 = vmatmul.mubr.f32.gmra.mrb[0].mxu0 %v1339
      %v1341 = vpop.f32.mrb[0].mxu0
      %v1342 = vadd.f32 %v1175, %v1341
      %v1343 = vpop.f32.mrb[0].mxu0
      %1344 = vdwg.mxu0
      %1345 = vmatprep.subr.mxu0 0.0
      %v1346 = vand.u32 %v347, 4294901760
      %1347 = vmatpush1.msra.mxu0 %v1346
      %1348 = vmatprep.subr.mxu0 0.0
      %v1349 = vand.u32 %v348, 4294901760
      %1350 = vmatpush1.msra.mxu0 %v1349
      %1351 = vmatprep.subr.mxu0 0.0
      %1352 = vmatpush1.msra.mxu0 0.0
      %1353 = vmatprep.subr.mxu0 0.0
      %1354 = vmatpush1.msra.mxu0 0.0
      %1355 = vmatprep.subr.mxu0 0.0
      %1356 = vmatpush1.msra.mxu0 0.0
      %1357 = vmatprep.subr.mxu0 0.0
      %1358 = vmatpush1.msra.mxu0 0.0
      %1359 = vmatprep.subr.mxu0 0.0
      %1360 = vmatpush1.msra.mxu0 0.0
      %1361 = vmatprep.subr.mxu0 0.0
      %1362 = vmatpush1.msra.mxu0 0.0
      %1363 = vmatprep.subr.mxu0 0.0
      %1364 = vmatpush1.msra.mxu0 0.0
      %1365 = vmatprep.subr.mxu0 0.0
      %1366 = vmatpush1.msra.mxu0 0.0
      %1367 = vmatprep.subr.mxu0 0.0
      %1368 = vmatpush1.msra.mxu0 0.0
      %1369 = vmatprep.subr.mxu0 0.0
      %1370 = vmatpush1.msra.mxu0 0.0
      %1371 = vmatprep.subr.mxu0 0.0
      %1372 = vmatpush1.msra.mxu0 0.0
      %1373 = vmatprep.subr.mxu0 0.0
      %1374 = vmatpush1.msra.mxu0 0.0
      %1375 = vmatprep.subr.mxu0 0.0
      %1376 = vmatpush1.msra.mxu0 0.0
      %1377 = vmatprep.subr.mxu0 0.0
      %1378 = vmatpush1.msra.mxu0 0.0
      %1379 = vmatprep.subr.mxu0 0.0
      %1380 = vmatpush1.msra.mxu0 0.0
      %1381 = vmatprep.subr.mxu0 0.0
      %1382 = vmatpush1.msra.mxu0 0.0
      %1383 = vmatprep.subr.mxu0 0.0
      %1384 = vmatpush1.msra.mxu0 0.0
      %1385 = vmatprep.subr.mxu0 0.0
      %1386 = vmatpush1.msra.mxu0 0.0
      %1387 = vmatprep.subr.mxu0 0.0
      %1388 = vmatpush1.msra.mxu0 0.0
      %1389 = vmatprep.subr.mxu0 0.0
      %1390 = vmatpush1.msra.mxu0 0.0
      %1391 = vmatprep.subr.mxu0 0.0
      %1392 = vmatpush1.msra.mxu0 0.0
      %1393 = vmatprep.subr.mxu0 0.0
      %1394 = vmatpush1.msra.mxu0 0.0
      %1395 = vmatprep.subr.mxu0 0.0
      %1396 = vmatpush1.msra.mxu0 0.0
      %1397 = vmatprep.subr.mxu0 0.0
      %1398 = vmatpush1.msra.mxu0 0.0
      %1399 = vmatprep.subr.mxu0 0.0
      %1400 = vmatpush1.msra.mxu0 0.0
      %1401 = vmatprep.subr.mxu0 0.0
      %1402 = vmatpush1.msra.mxu0 0.0
      %1403 = vmatprep.subr.mxu0 0.0
      %1404 = vmatpush1.msra.mxu0 0.0
      %1405 = vmatprep.subr.mxu0 0.0
      %1406 = vmatpush1.msra.mxu0 0.0
      %1407 = vmatprep.subr.mxu0 0.0
      %1408 = vmatpush1.msra.mxu0 0.0
      %1409 = vmatprep.subr.mxu0 0.0
      %1410 = vmatpush1.msra.mxu0 0.0
      %1411 = vmatprep.mubr.f32.mxu0 0.0
      %v1412 = vand.u32 %v357, 4294901760
      %1413 = vmatmul.mubr.f32.gmra.mrb[0].mxu0 %v1412
      %v1414 = vpop.f32.mrb[0].mxu0
      %v1415 = vadd.f32 %v1252, %v1414
      %v1416 = vpop.f32.mrb[0].mxu0
      %1417 = vmatprep.mubr.f32.mxu0 0.0
      %v1418 = vand.u32 %v360, 4294901760
      %1419 = vmatmul.mubr.f32.gmra.mrb[0].mxu0 %v1418
      %v1420 = vpop.f32.mrb[0].mxu0
      %v1421 = vadd.f32 %v1258, %v1420
      %v1422 = vpop.f32.mrb[0].mxu0
      %1423 = vmatprep.mubr.f32.mxu0 0.0
      %v1424 = vand.u32 %v363, 4294901760
      %1425 = vmatmul.mubr.f32.gmra.mrb[0].mxu0 %v1424
      %v1426 = vpop.f32.mrb[0].mxu0
      %v1427 = vadd.f32 %v1264, %v1426
      %v1428 = vpop.f32.mrb[0].mxu0
      %1429 = vmatprep.mubr.f32.mxu0 0.0
      %v1430 = vand.u32 %v366, 4294901760
      %1431 = vmatmul.mubr.f32.gmra.mrb[0].mxu0 %v1430
      %v1432 = vpop.f32.mrb[0].mxu0
      %v1433 = vadd.f32 %v1270, %v1432
      %v1434 = vpop.f32.mrb[0].mxu0
      %1435 = vmatprep.mubr.f32.mxu0 0.0
      %v1436 = vand.u32 %v369, 4294901760
      %1437 = vmatmul.mubr.f32.gmra.mrb[0].mxu0 %v1436
      %v1438 = vpop.f32.mrb[0].mxu0
      %v1439 = vadd.f32 %v1276, %v1438
      %v1440 = vpop.f32.mrb[0].mxu0
      %1441 = vmatprep.mubr.f32.mxu0 0.0
      %v1442 = vand.u32 %v372, 4294901760
      %1443 = vmatmul.mubr.f32.gmra.mrb[0].mxu0 %v1442
      %v1444 = vpop.f32.mrb[0].mxu0
      %v1445 = vadd.f32 %v1282, %v1444
      %v1446 = vpop.f32.mrb[0].mxu0
      %1447 = vmatprep.mubr.f32.mxu0 0.0
      %v1448 = vand.u32 %v375, 4294901760
      %1449 = vmatmul.mubr.f32.gmra.mrb[0].mxu0 %v1448
      %v1450 = vpop.f32.mrb[0].mxu0
      %v1451 = vadd.f32 %v1288, %v1450
      %v1452 = vpop.f32.mrb[0].mxu0
      %1453 = vmatprep.mubr.f32.mxu0 0.0
      %v1454 = vand.u32 %v378, 4294901760
      %1455 = vmatmul.mubr.f32.gmra.mrb[0].mxu0 %v1454
      %v1456 = vpop.f32.mrb[0].mxu0
      %v1457 = vadd.f32 %v1294, %v1456
      %v1458 = vpop.f32.mrb[0].mxu0
      %1459 = vmatprep.mubr.f32.mxu0 0.0
      %v1460 = vand.u32 %v381, 4294901760
      %1461 = vmatmul.mubr.f32.gmra.mrb[0].mxu0 %v1460
      %v1462 = vpop.f32.mrb[0].mxu0
      %v1463 = vadd.f32 %v1300, %v1462
      %v1464 = vpop.f32.mrb[0].mxu0
      %1465 = vmatprep.mubr.f32.mxu0 0.0
      %v1466 = vand.u32 %v384, 4294901760
      %1467 = vmatmul.mubr.f32.gmra.mrb[0].mxu0 %v1466
      %v1468 = vpop.f32.mrb[0].mxu0
      %v1469 = vadd.f32 %v1306, %v1468
      %v1470 = vpop.f32.mrb[0].mxu0
      %1471 = vmatprep.mubr.f32.mxu0 0.0
      %v1472 = vand.u32 %v387, 4294901760
      %1473 = vmatmul.mubr.f32.gmra.mrb[0].mxu0 %v1472
      %v1474 = vpop.f32.mrb[0].mxu0
      %v1475 = vadd.f32 %v1312, %v1474
      %v1476 = vpop.f32.mrb[0].mxu0
      %1477 = vmatprep.mubr.f32.mxu0 0.0
      %v1478 = vand.u32 %v390, 4294901760
      %1479 = vmatmul.mubr.f32.gmra.mrb[0].mxu0 %v1478
      %v1480 = vpop.f32.mrb[0].mxu0
      %v1481 = vadd.f32 %v1318, %v1480
      %v1482 = vpop.f32.mrb[0].mxu0
      %1483 = vmatprep.mubr.f32.mxu0 0.0
      %v1484 = vand.u32 %v393, 4294901760
      %1485 = vmatmul.mubr.f32.gmra.mrb[0].mxu0 %v1484
      %v1486 = vpop.f32.mrb[0].mxu0
      %v1487 = vadd.f32 %v1324, %v1486
      %v1488 = vpop.f32.mrb[0].mxu0
      %1489 = vmatprep.mubr.f32.mxu0 0.0
      %v1490 = vand.u32 %v396, 4294901760
      %1491 = vmatmul.mubr.f32.gmra.mrb[0].mxu0 %v1490
      %v1492 = vpop.f32.mrb[0].mxu0
      %v1493 = vadd.f32 %v1330, %v1492
      %v1494 = vpop.f32.mrb[0].mxu0
      %1495 = vmatprep.mubr.f32.mxu0 0.0
      %v1496 = vand.u32 %v399, 4294901760
      %1497 = vmatmul.mubr.f32.gmra.mrb[0].mxu0 %v1496
      %v1498 = vpop.f32.mrb[0].mxu0
      %v1499 = vadd.f32 %v1336, %v1498
      %v1500 = vpop.f32.mrb[0].mxu0
      %1501 = vmatprep.mubr.f32.mxu0 0.0
      %v1502 = vand.u32 %v402, 4294901760
      %1503 = vmatmul.mubr.f32.gmra.mrb[0].mxu0 %v1502
      %v1504 = vpop.f32.mrb[0].mxu0
      %v1505 = vadd.f32 %v1342, %v1504
      %v1506 = vpop.f32.mrb[0].mxu0
      %1507 = vdwg.mxu0
      %1508 = vst [vmem:[#allocation6] sm:$0xff] %v1415
      %1509 = vst [vmem:[#allocation6 + $0x8] sm:$0xff] %v1421
      %1510 = vst [vmem:[#allocation6 + $0x10] sm:$0xff] %v1427
      %1511 = vst [vmem:[#allocation6 + $0x18] sm:$0xff] %v1433
      %1512 = vst [vmem:[#allocation6 + $0x20] sm:$0xff] %v1439
      %1513 = vst [vmem:[#allocation6 + $0x28] sm:$0xff] %v1445
      %1514 = vst [vmem:[#allocation6 + $0x30] sm:$0xff] %v1451
      %1515 = vst [vmem:[#allocation6 + $0x38] sm:$0xff] %v1457
      %1516 = vst [vmem:[#allocation6 + $0x40] sm:$0xff] %v1463
      %1517 = vst [vmem:[#allocation6 + $0x48] sm:$0xff] %v1469
      %1518 = vst [vmem:[#allocation6 + $0x50] sm:$0xff] %v1475
      %1519 = vst [vmem:[#allocation6 + $0x58] sm:$0xff] %v1481
      %1520 = vst [vmem:[#allocation6 + $0x60] sm:$0xff] %v1487
      %1521 = vst [vmem:[#allocation6 + $0x68] sm:$0xff] %v1493
      %1522 = vst [vmem:[#allocation6 + $0x70] sm:$0xff] %v1499
      %1523 = vst [vmem:[#allocation6 + $0x78] sm:$0xff] %v1505
    $region29: #{tpu_custom_call.1} parent=1 // pred_fallthru
      _
    // Predicated region
    $region30: #{tpu_custom_call.1} parent=1 // pred_check
      _
    $region31: #{tpu_custom_call.1} parent=1 // pred_check_branch
      %1525 = sbr.rel (0) target = $region33
    $region32: #{tpu_custom_call.1} parent=1 // pred_region
      %s1527 = ssub.s32 2048, 2048
      %1528 = vsyncadd [#allocation5], %s1527
      %s1529 = sshll.u32 [#allocation6], 4
      %s1530 = int_to_ptr.vmem [resolvable:$true] %s1529
      %1535 = dma.vmem_to_hbm [thread:$0]  %s1530, 2048, %s4, [#allocation5], 128, 128, 8
    $region33: #{tpu_custom_call.1} parent=1 // pred_fallthru
      _
    // Predicated region
    $region34: #{tpu_custom_call.1} parent=1 // pred_check
      _
    $region35: #{tpu_custom_call.1} parent=1 // pred_check_branch
      %1537 = sbr.rel (0) target = $region37
    $region36: #{tpu_custom_call.1} parent=1 // pred_region
      %1538 = dma.done [#allocation5], 2048
    $region37: #{tpu_custom_call.1} parent=1 // pred_fallthru
      _
    %1539 = vsyncpa [#allocation4], 1
    %1540 = vsyncpa [#allocation5], 1

</llo_original>
